<compile_context>
chip_gen: v7x
topology: tpu7x:2x2x1
jax: 0.10.0
libtpu: 0.0.40
codegen_flags: <defaults>
</compile_context>

<pallas_src>
import jax
import jax.numpy as jnp
from jax.experimental import pallas as pl
from jax.experimental.pallas import tpu as pltpu


# ----------------------------------------------------------------------------
# Stage A: init_hc + attention context + batched input-gate matmul + recurrence
# ----------------------------------------------------------------------------
def lstm_recurrence_kernel(enc_ref, embx_ref, wih_e_ref, wih_z_ref, whh_ref,
                           b_ref, wh_ref, bh_ref, wc_ref, bc_ref,
                           h_all_ref, xg_ref):
    """enc_ref   : [B, L, D]      f32
       embx_ref  : [T*B, E]       compute dtype (gathered embedding rows)
       wih_e_ref : [E, 4N]        compute dtype (W_ih columns for the embedding)
       wih_z_ref : [D, 4N]        compute dtype (W_ih columns for the context)
       whh_ref   : [N, 4N]        compute dtype
       b_ref     : [1, 4N]        f32  (bih + bhh folded)
       wh/wc     : [D, N], bh/bc: [1, N]
       h_all_ref : [T*B, N]       f32  (all hidden states, for the vocab matmul)
       xg_ref    : [T*B, 4N]      f32  scratch (batched input pre-activations)
    """
    M, N = h_all_ref.shape
    B = enc_ref.shape[0]
    L = enc_ref.shape[1]
    T = M // B
    cdt = wih_e_ref.dtype

    enc = enc_ref[...]                                   # [B, L, D] f32
    enc_sum = jnp.sum(enc, axis=1)                       # attention context z
    mean_enc = (enc_sum * (1.0 / L)).astype(cdt)         # init_hc input

    # init_hc
    h0 = (jnp.dot(mean_enc, wh_ref[...], preferred_element_type=jnp.float32)
          + bh_ref[...])                                 # [B, N] f32
    c0 = (jnp.dot(mean_enc, wc_ref[...], preferred_element_type=jnp.float32)
          + bc_ref[...])                                 # [B, N] f32

    # loop-invariant, batched embedding -> gate pre-activations (one MXU matmul)
    xg_ref[...] = jnp.dot(embx_ref[...], wih_e_ref[...],
                          preferred_element_type=jnp.float32)        # [T*B, 4N]

    # loop-invariant context -> gate pre-activations + folded biases
    z_gates = (jnp.dot(enc_sum.astype(cdt), wih_z_ref[...],
                       preferred_element_type=jnp.float32)
               + b_ref[...])                                          # [B, 4N]

    whh = whh_ref[...]                                                # [N, 4N]

    def step(t, carry):
        h, c = carry
        row = pl.multiple_of(t * B, 8)                    # sublane-aligned offset
        gates = (xg_ref[pl.ds(row, B), :] + z_gates
                 + jnp.dot(h.astype(cdt), whh,
                           preferred_element_type=jnp.float32))       # [B, 4N] f32
        i_g = jax.nn.sigmoid(gates[:, 0 * N:1 * N])
        f_g = jax.nn.sigmoid(gates[:, 1 * N:2 * N])
        g_g = jnp.tanh(gates[:, 2 * N:3 * N])
        o_g = jax.nn.sigmoid(gates[:, 3 * N:4 * N])
        c_new = f_g * c + i_g * g_g
        h_new = o_g * jnp.tanh(c_new)
        h_all_ref[pl.ds(row, B), :] = h_new.astype(h_all_ref.dtype)
        return h_new, c_new

    jax.lax.fori_loop(0, T, step, (h0, c0), unroll=True)


# ----------------------------------------------------------------------------
# Stage B: hoisted vocab projection, tiled over V (parallel grid axis)
# ----------------------------------------------------------------------------
def vocab_proj_kernel(h_ref, wv_ref, bv_ref, out_ref):
    """h_ref [M, N] f32 ; wv_ref [N, tv] ; bv_ref [1, tv] f32 ; out_ref [M, tv]"""
    out_ref[...] = (jnp.dot(h_ref[...].astype(wv_ref.dtype), wv_ref[...],
                            preferred_element_type=jnp.float32)
                    + bv_ref[...]).astype(out_ref.dtype)


# ----------------------------------------------------------------------------
# Wrapper
# ----------------------------------------------------------------------------
def _round_up(x, m):
    return ((x + m - 1) // m) * m


def _pad_axis(x, axis, new_size):
    pad = new_size - x.shape[axis]
    if pad == 0:
        return x
    widths = [(0, 0)] * x.ndim
    widths[axis] = (0, pad)
    return jnp.pad(x, widths)


def _pad_gates(w, n, n_pad):
    """Pad a [4*n, ...] gate-stacked array to [4*n_pad, ...] per gate block."""
    rest = w.shape[1:]
    w = w.reshape((4, n) + rest)
    w = _pad_axis(w, 1, n_pad)
    return w.reshape((4 * n_pad,) + rest)


def decoder_forward(enc_output, y, params, compute_dtype=jnp.float32,
                    v_tile=None):
    """enc_output: [B, L, D] f32, y: [B, T] int32 -> logits [B, V, T]."""
    B, L, D = enc_output.shape
    T = y.shape[1]
    V, E = params["emb"].shape
    N = params["wh"].shape[0]
    cdt = compute_dtype

    B_pad = _round_up(B, 8)          # sublane multiple
    N_pad = _round_up(N, 128)        # lane-aligned gate slices
    V_pad = _round_up(V, 128)        # lane-dense output
    if v_tile is None:               # 128-multiples map cleanly on all MXU gens
        v_tile = 512 if V_pad % 512 == 0 else (256 if V_pad % 256 == 0 else 128)
    M = T * B_pad

    # encoder features (kept f32; mean/sum over L done in-kernel)
    enc_p = _pad_axis(enc_output.astype(jnp.float32), 0, B_pad)       # [B_pad,L,D]

    # embedding lookup as a wrapper-side id gather (no one-hot, no [B,V]x[V,E])
    y_p = _pad_axis(y.astype(jnp.int32), 0, B_pad)                    # [B_pad, T]
    emb_x = params["emb"][y_p.T.reshape(-1)].astype(cdt)              # [T*B_pad,E]

    # weights: split W_ih into embedding / context parts, pad per gate, transpose
    wih = params["wih"]                                               # [4N, E+D]
    wih_e = _pad_gates(wih[:, :E], N, N_pad).T.astype(cdt)            # [E, 4Np]
    wih_z = _pad_gates(wih[:, E:], N, N_pad).T.astype(cdt)            # [D, 4Np]
    whh = _pad_axis(_pad_gates(params["whh"], N, N_pad), 1, N_pad)    # [4Np, Np]
    whh = whh.T.astype(cdt)                                           # [Np, 4Np]
    b_comb = _pad_gates(params["bih"] + params["bhh"], N, N_pad).reshape(1, -1)
    wh = _pad_axis(params["wh"], 0, N_pad).T.astype(cdt)              # [D, Np]
    bh = _pad_axis(params["bh"], 0, N_pad).reshape(1, -1)
    wc = _pad_axis(params["wc"], 0, N_pad).T.astype(cdt)              # [D, Np]
    bc = _pad_axis(params["bc"], 0, N_pad).reshape(1, -1)
    wv = _pad_axis(_pad_axis(params["wv"], 0, V_pad), 1, N_pad).T.astype(cdt)
    bv = _pad_axis(params["bv"], 0, V_pad).reshape(1, -1)             # [1, Vp]

    vmem = pl.BlockSpec(memory_space=pltpu.MemorySpace.VMEM)

    # ---- Stage A: recurrence, single invocation, everything VMEM resident ----
    h_all = pl.pallas_call(
        lstm_recurrence_kernel,
        out_shape=jax.ShapeDtypeStruct((M, N_pad), jnp.float32),
        in_specs=[vmem] * 10,
        out_specs=vmem,
        scratch_shapes=[pltpu.VMEM((M, 4 * N_pad), jnp.float32)],
        compiler_params=pltpu.CompilerParams(
            vmem_limit_bytes=32 * 1024 * 1024),
    )(enc_p, emb_x, wih_e, wih_z, whh, b_comb, wh, bh, wc, bc)

    # ---- Stage B: batched vocab projection, tiled/streamed over V ------------
    logits = pl.pallas_call(
        vocab_proj_kernel,
        out_shape=jax.ShapeDtypeStruct((M, V_pad), jnp.float32),
        grid_spec=pltpu.PrefetchScalarGridSpec(
            num_scalar_prefetch=0,
            grid=(V_pad // v_tile,),
            in_specs=[
                pl.BlockSpec((M, N_pad), lambda j: (0, 0)),
                pl.BlockSpec((N_pad, v_tile), lambda j: (0, j)),
                pl.BlockSpec((1, v_tile), lambda j: (0, j)),
            ],
            out_specs=pl.BlockSpec((M, v_tile), lambda j: (0, j)),
        ),
        compiler_params=pltpu.CompilerParams(
            dimension_semantics=("parallel",),
            vmem_limit_bytes=32 * 1024 * 1024),
    )(h_all, wv, bv)

    # [T*B_pad, V_pad] -> [T, B, V] -> [B, V, T] (PyTorch return layout).
    # Writing T as the lane dim in-kernel would be worse; the transpose is left
    # to XLA (negligible at these sizes; downstream could consume [T, B, V]).
    logits = logits.reshape(T, B_pad, V_pad)[:, :B, :V]
    return jnp.transpose(logits, (1, 2, 0))


# ----------------------------------------------------------------------------
# Pure-JAX reference mirroring the PyTorch forward exactly
# ----------------------------------------------------------------------------
def decoder_reference(enc_output, y, params):
    B, T = y.shape
    N = params["wh"].shape[0]
    mean_enc = enc_output.mean(axis=1)
    h = mean_enc @ params["wh"].T + params["bh"]
    c = mean_enc @ params["wc"].T + params["bc"]
    z = enc_output.sum(axis=1)          # softmax over singleton dim -> ones
    emb_y = params["emb"][y]            # [B, T, E]
    outs = []
    for t in range(T):
        x = jnp.concatenate([emb_y[:, t], z], axis=-1)
        gates = (x @ params["wih"].T + params["bih"]
                 + h @ params["whh"].T + params["bhh"])
        i_g = jax.nn.sigmoid(gates[:, 0 * N:1 * N])
        f_g = jax.nn.sigmoid(gates[:, 1 * N:2 * N])
        g_g = jnp.tanh(gates[:, 2 * N:3 * N])
        o_g = jax.nn.sigmoid(gates[:, 3 * N:4 * N])
        c = f_g * c + i_g * g_g
        h = o_g * jnp.tanh(c)
        outs.append(h @ params["wv"].T + params["bv"])
    P = jnp.stack(outs, axis=0)         # [T, B, V]
    return jnp.transpose(P, (1, 2, 0))  # [B, V, T]


def init_params(key, context_dim, emb_dim, lstm_dim, attn_dim, vocab_size):
    ks = jax.random.split(key, 12)
    u = lambda k, shape, s=0.1: jax.random.uniform(k, shape, jnp.float32, -s, s)
    emb = u(ks[0], (vocab_size, emb_dim))
    emb = emb.at[2].set(0.0)            # padding_idx=2 -> zero row
    return {
        "emb": emb,
        "wih": u(ks[1], (4 * lstm_dim, emb_dim + context_dim)),
        "bih": u(ks[2], (4 * lstm_dim,)),
        "whh": u(ks[3], (4 * lstm_dim, lstm_dim)),
        "bhh": u(ks[4], (4 * lstm_dim,)),
        "wh":  u(ks[5], (lstm_dim, context_dim)),
        "bh":  u(ks[6], (lstm_dim,)),
        "wc":  u(ks[7], (lstm_dim, context_dim)),
        "bc":  u(ks[8], (lstm_dim,)),
        "wv":  u(ks[9], (vocab_size, lstm_dim)),
        "bv":  u(ks[10], (vocab_size,)),
        # Attention's encoder_att / decoder_att / full_att are dead code
        # (softmax over a singleton dim) and intentionally not materialized.
    }


if __name__ == "__main__":
    B, L = 2, 8
    context_dim, emb_dim, lstm_dim, attn_dim, vocab_size = 16, 8, 32, 8, 32
    T = 6

    key = jax.random.PRNGKey(0)
    k_enc, k_y, k_par = jax.random.split(key, 3)
    enc_output = jax.random.normal(k_enc, (B, L, context_dim), jnp.float32)
    y = jax.random.randint(k_y, (B, T), 0, vocab_size, jnp.int32)
    params = init_params(k_par, context_dim, emb_dim, lstm_dim, attn_dim,
                         vocab_size)

    ref = decoder_reference(enc_output, y, params)

    # f32 path: exact parity with the PyTorch-equivalent reference
    out_f32 = jax.block_until_ready(
        decoder_forward(enc_output, y, params, compute_dtype=jnp.float32))
    assert out_f32.shape == (B, vocab_size, T), out_f32.shape
    assert jnp.allclose(out_f32, ref, rtol=1e-4, atol=1e-4), (
        float(jnp.max(jnp.abs(out_f32 - ref))))

    # bf16 matmul-operand path (MXU-native dtype on v5e/v6e/v7x); f32 state/accum
    out_bf16 = jax.block_until_ready(
        decoder_forward(enc_output, y, params, compute_dtype=jnp.bfloat16))
    assert jnp.allclose(out_bf16, ref, rtol=3e-2, atol=3e-2), (
        float(jnp.max(jnp.abs(out_bf16 - ref))))

    print("KERNEL_OK")
</pallas_src>

<mosaic_0001>
module attributes {stable_mosaic.version = 11 : i64} {
  func.func @lstm_recurrence_kernel(%arg0: memref<8x8x16xf32, #tpu.memory_space<vmem>>, %arg1: memref<48x8xf32, #tpu.memory_space<vmem>>, %arg2: memref<8x512xf32, #tpu.memory_space<vmem>>, %arg3: memref<16x512xf32, #tpu.memory_space<vmem>>, %arg4: memref<128x512xf32, #tpu.memory_space<vmem>>, %arg5: memref<1x512xf32, #tpu.memory_space<vmem>>, %arg6: memref<16x128xf32, #tpu.memory_space<vmem>>, %arg7: memref<1x128xf32, #tpu.memory_space<vmem>>, %arg8: memref<16x128xf32, #tpu.memory_space<vmem>>, %arg9: memref<1x128xf32, #tpu.memory_space<vmem>>, %arg10: memref<48x128xf32, #tpu.memory_space<vmem>>, %arg11: memref<48x512xf32, #tpu.memory_space<vmem>>) attributes {dimension_semantics = [], scalar_prefetch = 0 : i64, scratch_operands = 1 : i64, tpu.core_type = #tpu.core_type<tc>} {
    %c0 = arith.constant 0 : index
    %c0_0 = arith.constant 0 : index
    %c0_1 = arith.constant 0 : index
    %0 = vector.load %arg0[%c0, %c0_0, %c0_1] : memref<8x8x16xf32, #tpu.memory_space<vmem>>, vector<8x8x16xf32>
    %cst = arith.constant dense<0.000000e+00> : vector<8x16xf32>
    %1 = vector.multi_reduction <add>, %0, %cst [1] : vector<8x8x16xf32> to vector<8x16xf32>
    %cst_2 = arith.constant 1.250000e-01 : f32
    %2 = vector.broadcast %cst_2 : f32 to vector<8x16xf32>
    %3 = arith.mulf %1, %2 : vector<8x16xf32>
    %c0_3 = arith.constant 0 : index
    %c0_4 = arith.constant 0 : index
    %4 = vector.load %arg6[%c0_3, %c0_4] : memref<16x128xf32, #tpu.memory_space<vmem>>, vector<16x128xf32>
    %cst_5 = arith.constant dense<0.000000e+00> : vector<8x128xf32>
    %5 = tpu.matmul %3, %4, %cst_5 {dimension_numbers = #tpu.dot_dimension_numbers<[1], [0], [0], [1], [0, 0, 1, 1], [], []>} : vector<8x16xf32>, vector<16x128xf32>, vector<8x128xf32> -> vector<8x128xf32>
    %c0_6 = arith.constant 0 : index
    %c0_7 = arith.constant 0 : index
    %6 = vector.load %arg7[%c0_6, %c0_7] : memref<1x128xf32, #tpu.memory_space<vmem>>, vector<1x128xf32>
    %7 = vector.broadcast %6 : vector<1x128xf32> to vector<8x128xf32>
    %8 = arith.addf %5, %7 : vector<8x128xf32>
    %c0_8 = arith.constant 0 : index
    %c0_9 = arith.constant 0 : index
    %9 = vector.load %arg8[%c0_8, %c0_9] : memref<16x128xf32, #tpu.memory_space<vmem>>, vector<16x128xf32>
    %cst_10 = arith.constant dense<0.000000e+00> : vector<8x128xf32>
    %10 = tpu.matmul %3, %9, %cst_10 {dimension_numbers = #tpu.dot_dimension_numbers<[1], [0], [0], [1], [0, 0, 1, 1], [], []>} : vector<8x16xf32>, vector<16x128xf32>, vector<8x128xf32> -> vector<8x128xf32>
    %c0_11 = arith.constant 0 : index
    %c0_12 = arith.constant 0 : index
    %11 = vector.load %arg9[%c0_11, %c0_12] : memref<1x128xf32, #tpu.memory_space<vmem>>, vector<1x128xf32>
    %12 = vector.broadcast %11 : vector<1x128xf32> to vector<8x128xf32>
    %13 = arith.addf %10, %12 : vector<8x128xf32>
    %c0_13 = arith.constant 0 : index
    %c0_14 = arith.constant 0 : index
    %14 = vector.load %arg1[%c0_13, %c0_14] : memref<48x8xf32, #tpu.memory_space<vmem>>, vector<48x8xf32>
    %c0_15 = arith.constant 0 : index
    %c0_16 = arith.constant 0 : index
    %15 = vector.load %arg2[%c0_15, %c0_16] : memref<8x512xf32, #tpu.memory_space<vmem>>, vector<8x512xf32>
    %cst_17 = arith.constant dense<0.000000e+00> : vector<48x512xf32>
    %16 = tpu.matmul %14, %15, %cst_17 {dimension_numbers = #tpu.dot_dimension_numbers<[1], [0], [0], [1], [0, 0, 1, 1], [], []>} : vector<48x8xf32>, vector<8x512xf32>, vector<48x512xf32> -> vector<48x512xf32>
    %c0_18 = arith.constant 0 : index
    %c0_19 = arith.constant 0 : index
    %17 = vector.load %arg11[%c0_18, %c0_19] : memref<48x512xf32, #tpu.memory_space<vmem>>, vector<48x512xf32>
    tpu.vector_store %arg11[%c0_18, %c0_19], %16 {strides = array<i32>} : memref<48x512xf32, #tpu.memory_space<vmem>>, vector<48x512xf32>,
    %c0_20 = arith.constant 0 : index
    %c0_21 = arith.constant 0 : index
    %18 = vector.load %arg3[%c0_20, %c0_21] : memref<16x512xf32, #tpu.memory_space<vmem>>, vector<16x512xf32>
    %cst_22 = arith.constant dense<0.000000e+00> : vector<8x512xf32>
    %19 = tpu.matmul %1, %18, %cst_22 {dimension_numbers = #tpu.dot_dimension_numbers<[1], [0], [0], [1], [0, 0, 1, 1], [], []>} : vector<8x16xf32>, vector<16x512xf32>, vector<8x512xf32> -> vector<8x512xf32>
    %c0_23 = arith.constant 0 : index
    %c0_24 = arith.constant 0 : index
    %20 = vector.load %arg5[%c0_23, %c0_24] : memref<1x512xf32, #tpu.memory_space<vmem>>, vector<1x512xf32>
    %21 = vector.broadcast %20 : vector<1x512xf32> to vector<8x512xf32>
    %22 = arith.addf %19, %21 : vector<8x512xf32>
    %c0_25 = arith.constant 0 : index
    %c0_26 = arith.constant 0 : index
    %23 = vector.load %arg4[%c0_25, %c0_26] : memref<128x512xf32, #tpu.memory_space<vmem>>, vector<128x512xf32>
    %c0_i32 = arith.constant 0 : i32
    %c8_i32 = arith.constant 8 : i32
    %24 = arith.muli %c0_i32, %c8_i32 : i32
    %25 = tpu.assume_multiple %24, 8 : i32
    %26 = arith.index_cast %25 : i32 to index
    %c0_27 = arith.constant 0 : index
    %27 = vector.load %arg11[%26, %c0_27] : memref<48x512xf32, #tpu.memory_space<vmem>>, vector<8x512xf32>
    %28 = arith.addf %27, %22 : vector<8x512xf32>
    %cst_28 = arith.constant dense<0.000000e+00> : vector<8x512xf32>
    %29 = tpu.matmul %8, %23, %cst_28 {dimension_numbers = #tpu.dot_dimension_numbers<[1], [0], [0], [1], [0, 0, 1, 1], [], []>} : vector<8x128xf32>, vector<128x512xf32>, vector<8x512xf32> -> vector<8x512xf32>
    %30 = arith.addf %28, %29 : vector<8x512xf32>
    %31 = vector.extract_strided_slice %30 {offsets = [0, 0], sizes = [8, 128], strides = [1, 1]} : vector<8x512xf32> to vector<8x128xf32>
    %32 = arith.negf %31 : vector<8x128xf32>
    %33 = math.exp %32 : vector<8x128xf32>
    %cst_29 = arith.constant 1.000000e+00 : f32
    %34 = vector.broadcast %cst_29 : f32 to vector<8x128xf32>
    %35 = arith.addf %34, %33 : vector<8x128xf32>
    %36 = arith.divf %34, %35 : vector<8x128xf32>
    %37 = vector.extract_strided_slice %30 {offsets = [0, 128], sizes = [8, 128], strides = [1, 1]} : vector<8x512xf32> to vector<8x128xf32>
    %38 = arith.negf %37 : vector<8x128xf32>
    %39 = math.exp %38 : vector<8x128xf32>
    %cst_30 = arith.constant 1.000000e+00 : f32
    %40 = vector.broadcast %cst_30 : f32 to vector<8x128xf32>
    %41 = arith.addf %40, %39 : vector<8x128xf32>
    %42 = arith.divf %40, %41 : vector<8x128xf32>
    %43 = vector.extract_strided_slice %30 {offsets = [0, 256], sizes = [8, 128], strides = [1, 1]} : vector<8x512xf32> to vector<8x128xf32>
    %44 = math.tanh %43 : vector<8x128xf32>
    %45 = vector.extract_strided_slice %30 {offsets = [0, 384], sizes = [8, 128], strides = [1, 1]} : vector<8x512xf32> to vector<8x128xf32>
    %46 = arith.negf %45 : vector<8x128xf32>
    %47 = math.exp %46 : vector<8x128xf32>
    %cst_31 = arith.constant 1.000000e+00 : f32
    %48 = vector.broadcast %cst_31 : f32 to vector<8x128xf32>
    %49 = arith.addf %48, %47 : vector<8x128xf32>
    %50 = arith.divf %48, %49 : vector<8x128xf32>
    %51 = arith.mulf %42, %13 : vector<8x128xf32>
    %52 = arith.mulf %36, %44 : vector<8x128xf32>
    %53 = arith.addf %51, %52 : vector<8x128xf32>
    %54 = math.tanh %53 : vector<8x128xf32>
    %55 = arith.mulf %50, %54 : vector<8x128xf32>
    %56 = arith.index_cast %25 : i32 to index
    %c0_32 = arith.constant 0 : index
    %57 = vector.load %arg10[%56, %c0_32] : memref<48x128xf32, #tpu.memory_space<vmem>>, vector<8x128xf32>
    tpu.vector_store %arg10[%56, %c0_32], %55 {strides = array<i32>} : memref<48x128xf32, #tpu.memory_space<vmem>>, vector<8x128xf32>,
    %c1_i32 = arith.constant 1 : i32
    %c8_i32_33 = arith.constant 8 : i32
    %58 = arith.muli %c1_i32, %c8_i32_33 : i32
    %59 = tpu.assume_multiple %58, 8 : i32
    %60 = arith.index_cast %59 : i32 to index
    %c0_34 = arith.constant 0 : index
    %61 = vector.load %arg11[%60, %c0_34] : memref<48x512xf32, #tpu.memory_space<vmem>>, vector<8x512xf32>
    %62 = arith.addf %61, %22 : vector<8x512xf32>
    %cst_35 = arith.constant dense<0.000000e+00> : vector<8x512xf32>
    %63 = tpu.matmul %55, %23, %cst_35 {dimension_numbers = #tpu.dot_dimension_numbers<[1], [0], [0], [1], [0, 0, 1, 1], [], []>} : vector<8x128xf32>, vector<128x512xf32>, vector<8x512xf32> -> vector<8x512xf32>
    %64 = arith.addf %62, %63 : vector<8x512xf32>
    %65 = vector.extract_strided_slice %64 {offsets = [0, 0], sizes = [8, 128], strides = [1, 1]} : vector<8x512xf32> to vector<8x128xf32>
    %66 = arith.negf %65 : vector<8x128xf32>
    %67 = math.exp %66 : vector<8x128xf32>
    %cst_36 = arith.constant 1.000000e+00 : f32
    %68 = vector.broadcast %cst_36 : f32 to vector<8x128xf32>
    %69 = arith.addf %68, %67 : vector<8x128xf32>
    %70 = arith.divf %68, %69 : vector<8x128xf32>
    %71 = vector.extract_strided_slice %64 {offsets = [0, 128], sizes = [8, 128], strides = [1, 1]} : vector<8x512xf32> to vector<8x128xf32>
    %72 = arith.negf %71 : vector<8x128xf32>
    %73 = math.exp %72 : vector<8x128xf32>
    %cst_37 = arith.constant 1.000000e+00 : f32
    %74 = vector.broadcast %cst_37 : f32 to vector<8x128xf32>
    %75 = arith.addf %74, %73 : vector<8x128xf32>
    %76 = arith.divf %74, %75 : vector<8x128xf32>
    %77 = vector.extract_strided_slice %64 {offsets = [0, 256], sizes = [8, 128], strides = [1, 1]} : vector<8x512xf32> to vector<8x128xf32>
    %78 = math.tanh %77 : vector<8x128xf32>
    %79 = vector.extract_strided_slice %64 {offsets = [0, 384], sizes = [8, 128], strides = [1, 1]} : vector<8x512xf32> to vector<8x128xf32>
    %80 = arith.negf %79 : vector<8x128xf32>
    %81 = math.exp %80 : vector<8x128xf32>
    %cst_38 = arith.constant 1.000000e+00 : f32
    %82 = vector.broadcast %cst_38 : f32 to vector<8x128xf32>
    %83 = arith.addf %82, %81 : vector<8x128xf32>
    %84 = arith.divf %82, %83 : vector<8x128xf32>
    %85 = arith.mulf %76, %53 : vector<8x128xf32>
    %86 = arith.mulf %70, %78 : vector<8x128xf32>
    %87 = arith.addf %85, %86 : vector<8x128xf32>
    %88 = math.tanh %87 : vector<8x128xf32>
    %89 = arith.mulf %84, %88 : vector<8x128xf32>
    %90 = arith.index_cast %59 : i32 to index
    %c0_39 = arith.constant 0 : index
    %91 = vector.load %arg10[%90, %c0_39] : memref<48x128xf32, #tpu.memory_space<vmem>>, vector<8x128xf32>
    tpu.vector_store %arg10[%90, %c0_39], %89 {strides = array<i32>} : memref<48x128xf32, #tpu.memory_space<vmem>>, vector<8x128xf32>,
    %c2_i32 = arith.constant 2 : i32
    %c8_i32_40 = arith.constant 8 : i32
    %92 = arith.muli %c2_i32, %c8_i32_40 : i32
    %93 = tpu.assume_multiple %92, 8 : i32
    %94 = arith.index_cast %93 : i32 to index
    %c0_41 = arith.constant 0 : index
    %95 = vector.load %arg11[%94, %c0_41] : memref<48x512xf32, #tpu.memory_space<vmem>>, vector<8x512xf32>
    %96 = arith.addf %95, %22 : vector<8x512xf32>
    %cst_42 = arith.constant dense<0.000000e+00> : vector<8x512xf32>
    %97 = tpu.matmul %89, %23, %cst_42 {dimension_numbers = #tpu.dot_dimension_numbers<[1], [0], [0], [1], [0, 0, 1, 1], [], []>} : vector<8x128xf32>, vector<128x512xf32>, vector<8x512xf32> -> vector<8x512xf32>
    %98 = arith.addf %96, %97 : vector<8x512xf32>
    %99 = vector.extract_strided_slice %98 {offsets = [0, 0], sizes = [8, 128], strides = [1, 1]} : vector<8x512xf32> to vector<8x128xf32>
    %100 = arith.negf %99 : vector<8x128xf32>
    %101 = math.exp %100 : vector<8x128xf32>
    %cst_43 = arith.constant 1.000000e+00 : f32
    %102 = vector.broadcast %cst_43 : f32 to vector<8x128xf32>
    %103 = arith.addf %102, %101 : vector<8x128xf32>
    %104 = arith.divf %102, %103 : vector<8x128xf32>
    %105 = vector.extract_strided_slice %98 {offsets = [0, 128], sizes = [8, 128], strides = [1, 1]} : vector<8x512xf32> to vector<8x128xf32>
    %106 = arith.negf %105 : vector<8x128xf32>
    %107 = math.exp %106 : vector<8x128xf32>
    %cst_44 = arith.constant 1.000000e+00 : f32
    %108 = vector.broadcast %cst_44 : f32 to vector<8x128xf32>
    %109 = arith.addf %108, %107 : vector<8x128xf32>
    %110 = arith.divf %108, %109 : vector<8x128xf32>
    %111 = vector.extract_strided_slice %98 {offsets = [0, 256], sizes = [8, 128], strides = [1, 1]} : vector<8x512xf32> to vector<8x128xf32>
    %112 = math.tanh %111 : vector<8x128xf32>
    %113 = vector.extract_strided_slice %98 {offsets = [0, 384], sizes = [8, 128], strides = [1, 1]} : vector<8x512xf32> to vector<8x128xf32>
    %114 = arith.negf %113 : vector<8x128xf32>
    %115 = math.exp %114 : vector<8x128xf32>
    %cst_45 = arith.constant 1.000000e+00 : f32
    %116 = vector.broadcast %cst_45 : f32 to vector<8x128xf32>
    %117 = arith.addf %116, %115 : vector<8x128xf32>
    %118 = arith.divf %116, %117 : vector<8x128xf32>
    %119 = arith.mulf %110, %87 : vector<8x128xf32>
    %120 = arith.mulf %104, %112 : vector<8x128xf32>
    %121 = arith.addf %119, %120 : vector<8x128xf32>
    %122 = math.tanh %121 : vector<8x128xf32>
    %123 = arith.mulf %118, %122 : vector<8x128xf32>
    %124 = arith.index_cast %93 : i32 to index
    %c0_46 = arith.constant 0 : index
    %125 = vector.load %arg10[%124, %c0_46] : memref<48x128xf32, #tpu.memory_space<vmem>>, vector<8x128xf32>
    tpu.vector_store %arg10[%124, %c0_46], %123 {strides = array<i32>} : memref<48x128xf32, #tpu.memory_space<vmem>>, vector<8x128xf32>,
    %c3_i32 = arith.constant 3 : i32
    %c8_i32_47 = arith.constant 8 : i32
    %126 = arith.muli %c3_i32, %c8_i32_47 : i32
    %127 = tpu.assume_multiple %126, 8 : i32
    %128 = arith.index_cast %127 : i32 to index
    %c0_48 = arith.constant 0 : index
    %129 = vector.load %arg11[%128, %c0_48] : memref<48x512xf32, #tpu.memory_space<vmem>>, vector<8x512xf32>
    %130 = arith.addf %129, %22 : vector<8x512xf32>
    %cst_49 = arith.constant dense<0.000000e+00> : vector<8x512xf32>
    %131 = tpu.matmul %123, %23, %cst_49 {dimension_numbers = #tpu.dot_dimension_numbers<[1], [0], [0], [1], [0, 0, 1, 1], [], []>} : vector<8x128xf32>, vector<128x512xf32>, vector<8x512xf32> -> vector<8x512xf32>
    %132 = arith.addf %130, %131 : vector<8x512xf32>
    %133 = vector.extract_strided_slice %132 {offsets = [0, 0], sizes = [8, 128], strides = [1, 1]} : vector<8x512xf32> to vector<8x128xf32>
    %134 = arith.negf %133 : vector<8x128xf32>
    %135 = math.exp %134 : vector<8x128xf32>
    %cst_50 = arith.constant 1.000000e+00 : f32
    %136 = vector.broadcast %cst_50 : f32 to vector<8x128xf32>
    %137 = arith.addf %136, %135 : vector<8x128xf32>
    %138 = arith.divf %136, %137 : vector<8x128xf32>
    %139 = vector.extract_strided_slice %132 {offsets = [0, 128], sizes = [8, 128], strides = [1, 1]} : vector<8x512xf32> to vector<8x128xf32>
    %140 = arith.negf %139 : vector<8x128xf32>
    %141 = math.exp %140 : vector<8x128xf32>
    %cst_51 = arith.constant 1.000000e+00 : f32
    %142 = vector.broadcast %cst_51 : f32 to vector<8x128xf32>
    %143 = arith.addf %142, %141 : vector<8x128xf32>
    %144 = arith.divf %142, %143 : vector<8x128xf32>
    %145 = vector.extract_strided_slice %132 {offsets = [0, 256], sizes = [8, 128], strides = [1, 1]} : vector<8x512xf32> to vector<8x128xf32>
    %146 = math.tanh %145 : vector<8x128xf32>
    %147 = vector.extract_strided_slice %132 {offsets = [0, 384], sizes = [8, 128], strides = [1, 1]} : vector<8x512xf32> to vector<8x128xf32>
    %148 = arith.negf %147 : vector<8x128xf32>
    %149 = math.exp %148 : vector<8x128xf32>
    %cst_52 = arith.constant 1.000000e+00 : f32
    %150 = vector.broadcast %cst_52 : f32 to vector<8x128xf32>
    %151 = arith.addf %150, %149 : vector<8x128xf32>
    %152 = arith.divf %150, %151 : vector<8x128xf32>
    %153 = arith.mulf %144, %121 : vector<8x128xf32>
    %154 = arith.mulf %138, %146 : vector<8x128xf32>
    %155 = arith.addf %153, %154 : vector<8x128xf32>
    %156 = math.tanh %155 : vector<8x128xf32>
    %157 = arith.mulf %152, %156 : vector<8x128xf32>
    %158 = arith.index_cast %127 : i32 to index
    %c0_53 = arith.constant 0 : index
    %159 = vector.load %arg10[%158, %c0_53] : memref<48x128xf32, #tpu.memory_space<vmem>>, vector<8x128xf32>
    tpu.vector_store %arg10[%158, %c0_53], %157 {strides = array<i32>} : memref<48x128xf32, #tpu.memory_space<vmem>>, vector<8x128xf32>,
    %c4_i32 = arith.constant 4 : i32
    %c8_i32_54 = arith.constant 8 : i32
    %160 = arith.muli %c4_i32, %c8_i32_54 : i32
    %161 = tpu.assume_multiple %160, 8 : i32
    %162 = arith.index_cast %161 : i32 to index
    %c0_55 = arith.constant 0 : index
    %163 = vector.load %arg11[%162, %c0_55] : memref<48x512xf32, #tpu.memory_space<vmem>>, vector<8x512xf32>
    %164 = arith.addf %163, %22 : vector<8x512xf32>
    %cst_56 = arith.constant dense<0.000000e+00> : vector<8x512xf32>
    %165 = tpu.matmul %157, %23, %cst_56 {dimension_numbers = #tpu.dot_dimension_numbers<[1], [0], [0], [1], [0, 0, 1, 1], [], []>} : vector<8x128xf32>, vector<128x512xf32>, vector<8x512xf32> -> vector<8x512xf32>
    %166 = arith.addf %164, %165 : vector<8x512xf32>
    %167 = vector.extract_strided_slice %166 {offsets = [0, 0], sizes = [8, 128], strides = [1, 1]} : vector<8x512xf32> to vector<8x128xf32>
    %168 = arith.negf %167 : vector<8x128xf32>
    %169 = math.exp %168 : vector<8x128xf32>
    %cst_57 = arith.constant 1.000000e+00 : f32
    %170 = vector.broadcast %cst_57 : f32 to vector<8x128xf32>
    %171 = arith.addf %170, %169 : vector<8x128xf32>
    %172 = arith.divf %170, %171 : vector<8x128xf32>
    %173 = vector.extract_strided_slice %166 {offsets = [0, 128], sizes = [8, 128], strides = [1, 1]} : vector<8x512xf32> to vector<8x128xf32>
    %174 = arith.negf %173 : vector<8x128xf32>
    %175 = math.exp %174 : vector<8x128xf32>
    %cst_58 = arith.constant 1.000000e+00 : f32
    %176 = vector.broadcast %cst_58 : f32 to vector<8x128xf32>
    %177 = arith.addf %176, %175 : vector<8x128xf32>
    %178 = arith.divf %176, %177 : vector<8x128xf32>
    %179 = vector.extract_strided_slice %166 {offsets = [0, 256], sizes = [8, 128], strides = [1, 1]} : vector<8x512xf32> to vector<8x128xf32>
    %180 = math.tanh %179 : vector<8x128xf32>
    %181 = vector.extract_strided_slice %166 {offsets = [0, 384], sizes = [8, 128], strides = [1, 1]} : vector<8x512xf32> to vector<8x128xf32>
    %182 = arith.negf %181 : vector<8x128xf32>
    %183 = math.exp %182 : vector<8x128xf32>
    %cst_59 = arith.constant 1.000000e+00 : f32
    %184 = vector.broadcast %cst_59 : f32 to vector<8x128xf32>
    %185 = arith.addf %184, %183 : vector<8x128xf32>
    %186 = arith.divf %184, %185 : vector<8x128xf32>
    %187 = arith.mulf %178, %155 : vector<8x128xf32>
    %188 = arith.mulf %172, %180 : vector<8x128xf32>
    %189 = arith.addf %187, %188 : vector<8x128xf32>
    %190 = math.tanh %189 : vector<8x128xf32>
    %191 = arith.mulf %186, %190 : vector<8x128xf32>
    %192 = arith.index_cast %161 : i32 to index
    %c0_60 = arith.constant 0 : index
    %193 = vector.load %arg10[%192, %c0_60] : memref<48x128xf32, #tpu.memory_space<vmem>>, vector<8x128xf32>
    tpu.vector_store %arg10[%192, %c0_60], %191 {strides = array<i32>} : memref<48x128xf32, #tpu.memory_space<vmem>>, vector<8x128xf32>,
    %c5_i32 = arith.constant 5 : i32
    %c8_i32_61 = arith.constant 8 : i32
    %194 = arith.muli %c5_i32, %c8_i32_61 : i32
    %195 = tpu.assume_multiple %194, 8 : i32
    %196 = arith.index_cast %195 : i32 to index
    %c0_62 = arith.constant 0 : index
    %197 = vector.load %arg11[%196, %c0_62] : memref<48x512xf32, #tpu.memory_space<vmem>>, vector<8x512xf32>
    %198 = arith.addf %197, %22 : vector<8x512xf32>
    %cst_63 = arith.constant dense<0.000000e+00> : vector<8x512xf32>
    %199 = tpu.matmul %191, %23, %cst_63 {dimension_numbers = #tpu.dot_dimension_numbers<[1], [0], [0], [1], [0, 0, 1, 1], [], []>} : vector<8x128xf32>, vector<128x512xf32>, vector<8x512xf32> -> vector<8x512xf32>
    %200 = arith.addf %198, %199 : vector<8x512xf32>
    %201 = vector.extract_strided_slice %200 {offsets = [0, 0], sizes = [8, 128], strides = [1, 1]} : vector<8x512xf32> to vector<8x128xf32>
    %202 = arith.negf %201 : vector<8x128xf32>
    %203 = math.exp %202 : vector<8x128xf32>
    %cst_64 = arith.constant 1.000000e+00 : f32
    %204 = vector.broadcast %cst_64 : f32 to vector<8x128xf32>
    %205 = arith.addf %204, %203 : vector<8x128xf32>
    %206 = arith.divf %204, %205 : vector<8x128xf32>
    %207 = vector.extract_strided_slice %200 {offsets = [0, 128], sizes = [8, 128], strides = [1, 1]} : vector<8x512xf32> to vector<8x128xf32>
    %208 = arith.negf %207 : vector<8x128xf32>
    %209 = math.exp %208 : vector<8x128xf32>
    %cst_65 = arith.constant 1.000000e+00 : f32
    %210 = vector.broadcast %cst_65 : f32 to vector<8x128xf32>
    %211 = arith.addf %210, %209 : vector<8x128xf32>
    %212 = arith.divf %210, %211 : vector<8x128xf32>
    %213 = vector.extract_strided_slice %200 {offsets = [0, 256], sizes = [8, 128], strides = [1, 1]} : vector<8x512xf32> to vector<8x128xf32>
    %214 = math.tanh %213 : vector<8x128xf32>
    %215 = vector.extract_strided_slice %200 {offsets = [0, 384], sizes = [8, 128], strides = [1, 1]} : vector<8x512xf32> to vector<8x128xf32>
    %216 = arith.negf %215 : vector<8x128xf32>
    %217 = math.exp %216 : vector<8x128xf32>
    %cst_66 = arith.constant 1.000000e+00 : f32
    %218 = vector.broadcast %cst_66 : f32 to vector<8x128xf32>
    %219 = arith.addf %218, %217 : vector<8x128xf32>
    %220 = arith.divf %218, %219 : vector<8x128xf32>
    %221 = arith.mulf %212, %189 : vector<8x128xf32>
    %222 = arith.mulf %206, %214 : vector<8x128xf32>
    %223 = arith.addf %221, %222 : vector<8x128xf32>
    %224 = math.tanh %223 : vector<8x128xf32>
    %225 = arith.mulf %220, %224 : vector<8x128xf32>
    %226 = arith.index_cast %195 : i32 to index
    %c0_67 = arith.constant 0 : index
    %227 = vector.load %arg10[%226, %c0_67] : memref<48x128xf32, #tpu.memory_space<vmem>>, vector<8x128xf32>
    tpu.vector_store %arg10[%226, %c0_67], %225 {strides = array<i32>} : memref<48x128xf32, #tpu.memory_space<vmem>>, vector<8x128xf32>,
    %c6_i32 = arith.constant 6 : i32
    return
  }
}

</mosaic_0001>

<llo_original>
// kernel: tpu_custom_call.1
$region0: #{tpu_custom_call.1}
  #allocation0 [shape = 'u32[]', space=smem, size = 0x4, offset = 0x4, fixed_abs, tag = 'smem constant byte address 0x4 - core index']
  #allocation1 [shape = 'u32[144,128]{1,0:T(1,128)}', space=vmem, size = 0x12000, scoped, tag = 'internal scratch']
  #allocation2 [shape = 'f32[48,512]{1,0:T(8,128)}', space=vmem, size = 0x18000, scoped, tag = 'scratch operand']
  %s0 = inlined_call_operand.hbm [shape: f32[8,8,16], index: 0, kind: input, shape index: {}]
  %s1 = inlined_call_operand.vmem [shape: f32[48,8], index: 1, kind: input, shape index: {}]
  %s2 = inlined_call_operand.hbm [shape: f32[8,512], index: 2, kind: input, shape index: {}]
  %s3 = inlined_call_operand.vmem [shape: f32[16,512], index: 3, kind: input, shape index: {}]
  %s4 = inlined_call_operand.hbm [shape: f32[128,512], index: 4, kind: input, shape index: {}]
  %s5 = inlined_call_operand.hbm [shape: f32[1,512], index: 5, kind: input, shape index: {}]
  %s6 = inlined_call_operand.hbm [shape: f32[16,128], index: 6, kind: input, shape index: {}]
  %s7 = inlined_call_operand.vmem [shape: f32[1,128], index: 7, kind: input, shape index: {}]
  %s8 = inlined_call_operand.vmem [shape: f32[16,128], index: 8, kind: input, shape index: {}]
  %s9 = inlined_call_operand.vmem [shape: f32[1,128], index: 9, kind: input, shape index: {}]
  %s10 = inlined_call_operand.hbm [shape: f32[48,128], index: 10, kind: output, shape index: {}]
  %s11 = sld [smem:[#allocation0]]
  $region70: #{tpu_custom_call.1} parent=0
    _
  %s13 = ssub.s32 1, %s11
  %s14 = scalar_select 0, %s13, %s11
  $region1: #{tpu_custom_call.1} parent=0
    #allocation3 [shape = 'u8[32768]{0}', space=vmem, size = 0x8000, scoped, tag = 'input window, operand 0, single buffered']
    #allocation4 [shape = 's32[1]{0}', space=sflag, size = 0x4, scoped, tag = 'scoped memory for tpu_custom_call.1']
    #allocation5 [shape = 's32[1]{0}', space=sflag, size = 0x4, scoped, tag = 'scoped memory for tpu_custom_call.1']
    #allocation6 [shape = 'u8[16384]{0}', space=vmem, size = 0x4000, scoped, tag = 'input window, operand 2, single buffered']
    #allocation7 [shape = 's32[1]{0}', space=sflag, size = 0x4, scoped, tag = 'scoped memory for tpu_custom_call.1']
    #allocation8 [shape = 'u8[262144]{0}', space=vmem, size = 0x40000, scoped, tag = 'input window, operand 4, single buffered']
    #allocation9 [shape = 'u8[2048]{0}', space=vmem, size = 0x800, scoped, tag = 'input window, operand 5, single buffered']
    #allocation10 [shape = 's32[1]{0}', space=sflag, size = 0x4, scoped, tag = 'scoped memory for tpu_custom_call.1']
    #allocation11 [shape = 'u8[8192]{0}', space=vmem, size = 0x2000, scoped, tag = 'input window, operand 6, single buffered']
    #allocation12 [shape = 'u8[24576]{0}', space=vmem, size = 0x6000, scoped, tag = 'output window, operand 0, single buffered']
    %15 = vsyncpa [#allocation4], 0
    %16 = vsyncpa [#allocation7], 0
    %17 = vsyncpa [#allocation10], 0
    %18 = vsyncpa [#allocation5], 0
    // Predicated region
    $region2: #{tpu_custom_call.1} parent=1 // pred_check
      _
    $region3: #{tpu_custom_call.1} parent=1 // pred_check_branch
      %20 = sbr.rel (0) target = $region5
    $region4: #{tpu_custom_call.1} parent=1 // pred_region
      %s22 = ssub.s32 1024, 1024
      %23 = vsyncadd [#allocation4], %s22
      %s24 = sshll.u32 [#allocation3], 4
      %s25 = int_to_ptr.vmem [resolvable:$true] %s24
      %30 = dma.hbm_to_vmem [thread:$0]  %s0, 1024, %s25, [#allocation4], 128, 128, 8
    $region5: #{tpu_custom_call.1} parent=1 // pred_fallthru
      _
    // Predicated region
    $region6: #{tpu_custom_call.1} parent=1 // pred_check
      _
    $region7: #{tpu_custom_call.1} parent=1 // pred_check_branch
      %32 = sbr.rel (0) target = $region9
    $region8: #{tpu_custom_call.1} parent=1 // pred_region
      _
    $region9: #{tpu_custom_call.1} parent=1 // pred_fallthru
      _
    // Predicated region
    $region10: #{tpu_custom_call.1} parent=1 // pred_check
      _
    $region11: #{tpu_custom_call.1} parent=1 // pred_check_branch
      %34 = sbr.rel (0) target = $region13
    $region12: #{tpu_custom_call.1} parent=1 // pred_region
      %s36 = ssub.s32 512, 512
      %37 = vsyncadd [#allocation7], %s36
      %s39 = sshll.u32 [#allocation6], 4
      %s40 = int_to_ptr.vmem [resolvable:$true] %s39
      %42 = dma.hbm_to_vmem [thread:$0]  %s2, 512, %s40, [#allocation7]
    $region13: #{tpu_custom_call.1} parent=1 // pred_fallthru
      _
    // Predicated region
    $region14: #{tpu_custom_call.1} parent=1 // pred_check
      _
    $region15: #{tpu_custom_call.1} parent=1 // pred_check_branch
      %44 = sbr.rel (0) target = $region17
    $region16: #{tpu_custom_call.1} parent=1 // pred_region
      _
    $region17: #{tpu_custom_call.1} parent=1 // pred_fallthru
      _
    // Predicated region
    $region18: #{tpu_custom_call.1} parent=1 // pred_check
      _
    $region19: #{tpu_custom_call.1} parent=1 // pred_check_branch
      %46 = sbr.rel (0) target = $region21
    $region20: #{tpu_custom_call.1} parent=1 // pred_region
      %s48 = ssub.s32 8192, 8192
      %49 = vsyncadd [#allocation7], %s48
      %s50 = sshll.u32 [#allocation8], 4
      %s51 = int_to_ptr.vmem [resolvable:$true] %s50
      %56 = dma.hbm_to_vmem [thread:$0]  %s4, 8192, %s51, [#allocation7], 512, 512, 32
    $region21: #{tpu_custom_call.1} parent=1 // pred_fallthru
      _
    // Predicated region
    $region22: #{tpu_custom_call.1} parent=1 // pred_check
      _
    $region23: #{tpu_custom_call.1} parent=1 // pred_check_branch
      %58 = sbr.rel (0) target = $region25
    $region24: #{tpu_custom_call.1} parent=1 // pred_region
      %s60 = ssub.s32 64, 64
      %61 = vsyncadd [#allocation10], %s60
      %s63 = sshll.u32 [#allocation9], 4
      %s64 = int_to_ptr.vmem [resolvable:$true] %s63
      %66 = dma.hbm_to_vmem [thread:$0]  %s5, 64, %s64, [#allocation10]
    $region25: #{tpu_custom_call.1} parent=1 // pred_fallthru
      _
    // Predicated region
    $region26: #{tpu_custom_call.1} parent=1 // pred_check
      _
    $region27: #{tpu_custom_call.1} parent=1 // pred_check_branch
      %68 = sbr.rel (0) target = $region29
    $region28: #{tpu_custom_call.1} parent=1 // pred_region
      %s70 = ssub.s32 256, 256
      %71 = vsyncadd [#allocation10], %s70
      %s72 = sshll.u32 [#allocation11], 4
      %s73 = int_to_ptr.vmem [resolvable:$true] %s72
      %78 = dma.hbm_to_vmem [thread:$0]  %s6, 256, %s73, [#allocation10], 128, 128, 8
    $region29: #{tpu_custom_call.1} parent=1 // pred_fallthru
      _
    // Predicated region
    $region30: #{tpu_custom_call.1} parent=1 // pred_check
      _
    $region31: #{tpu_custom_call.1} parent=1 // pred_check_branch
      %80 = sbr.rel (0) target = $region33
    $region32: #{tpu_custom_call.1} parent=1 // pred_region
      _
    $region33: #{tpu_custom_call.1} parent=1 // pred_fallthru
      _
    // Predicated region
    $region34: #{tpu_custom_call.1} parent=1 // pred_check
      _
    $region35: #{tpu_custom_call.1} parent=1 // pred_check_branch
      %82 = sbr.rel (0) target = $region37
    $region36: #{tpu_custom_call.1} parent=1 // pred_region
      _
    $region37: #{tpu_custom_call.1} parent=1 // pred_fallthru
      _
    // Predicated region
    $region38: #{tpu_custom_call.1} parent=1 // pred_check
      _
    $region39: #{tpu_custom_call.1} parent=1 // pred_check_branch
      %84 = sbr.rel (0) target = $region41
    $region40: #{tpu_custom_call.1} parent=1 // pred_region
      _
    $region41: #{tpu_custom_call.1} parent=1 // pred_fallthru
      _
    // Predicated region
    $region42: #{tpu_custom_call.1} parent=1 // pred_check
      _
    $region43: #{tpu_custom_call.1} parent=1 // pred_check_branch
      %86 = sbr.rel (0) target = $region45
    $region44: #{tpu_custom_call.1} parent=1 // pred_region
      %87 = dma.done [#allocation4], 1024
    $region45: #{tpu_custom_call.1} parent=1 // pred_fallthru
      _
    // Predicated region
    $region46: #{tpu_custom_call.1} parent=1 // pred_check
      _
    $region47: #{tpu_custom_call.1} parent=1 // pred_check_branch
      %89 = sbr.rel (0) target = $region49
    $region48: #{tpu_custom_call.1} parent=1 // pred_region
      %90 = dma.done [#allocation7], 512
    $region49: #{tpu_custom_call.1} parent=1 // pred_fallthru
      _
    // Predicated region
    $region50: #{tpu_custom_call.1} parent=1 // pred_check
      _
    $region51: #{tpu_custom_call.1} parent=1 // pred_check_branch
      %92 = sbr.rel (0) target = $region53
    $region52: #{tpu_custom_call.1} parent=1 // pred_region
      %93 = dma.done [#allocation7], 8192
    $region53: #{tpu_custom_call.1} parent=1 // pred_fallthru
      _
    // Predicated region
    $region54: #{tpu_custom_call.1} parent=1 // pred_check
      _
    $region55: #{tpu_custom_call.1} parent=1 // pred_check_branch
      %95 = sbr.rel (0) target = $region57
    $region56: #{tpu_custom_call.1} parent=1 // pred_region
      %96 = dma.done [#allocation10], 64
    $region57: #{tpu_custom_call.1} parent=1 // pred_fallthru
      _
    // Predicated region
    $region58: #{tpu_custom_call.1} parent=1 // pred_check
      _
    $region59: #{tpu_custom_call.1} parent=1 // pred_check_branch
      %98 = sbr.rel (0) target = $region61
    $region60: #{tpu_custom_call.1} parent=1 // pred_region
      %99 = dma.done [#allocation10], 256
    $region61: #{tpu_custom_call.1} parent=1 // pred_fallthru
      _
    %v100 = vld [vmem:[#allocation3] sm:$0xff]
    %v101 = vld [vmem:[#allocation3 + $0x8] sm:$0xff]
    %v102 = vld [vmem:[#allocation3 + $0x10] sm:$0xff]
    %v103 = vld [vmem:[#allocation3 + $0x18] sm:$0xff]
    %v104 = vld [vmem:[#allocation3 + $0x20] sm:$0xff]
    %v105 = vld [vmem:[#allocation3 + $0x28] sm:$0xff]
    %v106 = vld [vmem:[#allocation3 + $0x30] sm:$0xff]
    %v107 = vld [vmem:[#allocation3 + $0x38] sm:$0xff]
    %vm108 = vcmask 130048
    %v109 = vsel %vm108, %v100, 0.0
    %v110 = vrot.slane %v109, 4
    %v111 = vadd.f32 %v109, %v110
    %v112 = vrot.slane %v111, 2
    %v113 = vadd.f32 %v111, %v112
    %v114 = vrot.slane %v113, 1
    %v115 = vadd.f32 %v113, %v114
    %v116 = vsel %vm108, %v101, 0.0
    %v117 = vrot.slane %v116, 4
    %v118 = vadd.f32 %v116, %v117
    %v119 = vrot.slane %v118, 2
    %v120 = vadd.f32 %v118, %v119
    %v121 = vrot.slane %v120, 1
    %v122 = vadd.f32 %v120, %v121
    %v123 = vsel %vm108, %v102, 0.0
    %v124 = vrot.slane %v123, 4
    %v125 = vadd.f32 %v123, %v124
    %v126 = vrot.slane %v125, 2
    %v127 = vadd.f32 %v125, %v126
    %v128 = vrot.slane %v127, 1
    %v129 = vadd.f32 %v127, %v128
    %v130 = vsel %vm108, %v103, 0.0
    %v131 = vrot.slane %v130, 4
    %v132 = vadd.f32 %v130, %v131
    %v133 = vrot.slane %v132, 2
    %v134 = vadd.f32 %v132, %v133
    %v135 = vrot.slane %v134, 1
    %v136 = vadd.f32 %v134, %v135
    %v137 = vsel %vm108, %v104, 0.0
    %v138 = vrot.slane %v137, 4
    %v139 = vadd.f32 %v137, %v138
    %v140 = vrot.slane %v139, 2
    %v141 = vadd.f32 %v139, %v140
    %v142 = vrot.slane %v141, 1
    %v143 = vadd.f32 %v141, %v142
    %v144 = vsel %vm108, %v105, 0.0
    %v145 = vrot.slane %v144, 4
    %v146 = vadd.f32 %v144, %v145
    %v147 = vrot.slane %v146, 2
    %v148 = vadd.f32 %v146, %v147
    %v149 = vrot.slane %v148, 1
    %v150 = vadd.f32 %v148, %v149
    %v151 = vsel %vm108, %v106, 0.0
    %v152 = vrot.slane %v151, 4
    %v153 = vadd.f32 %v151, %v152
    %v154 = vrot.slane %v153, 2
    %v155 = vadd.f32 %v153, %v154
    %v156 = vrot.slane %v155, 1
    %v157 = vadd.f32 %v155, %v156
    %v158 = vsel %vm108, %v107, 0.0
    %v159 = vrot.slane %v158, 4
    %v160 = vadd.f32 %v158, %v159
    %v161 = vrot.slane %v160, 2
    %v162 = vadd.f32 %v160, %v161
    %v163 = vrot.slane %v162, 1
    %v164 = vadd.f32 %v162, %v163
    %v165 = vmul.f32 %v115, 0.125
    %v166 = vmul.f32 %v122, 0.125
    %v167 = vmul.f32 %v129, 0.125
    %v168 = vmul.f32 %v136, 0.125
    %v169 = vmul.f32 %v143, 0.125
    %v170 = vmul.f32 %v150, 0.125
    %v171 = vmul.f32 %v157, 0.125
    %v172 = vmul.f32 %v164, 0.125
    %v173 = vld [vmem:[#allocation11] sm:$0xff]
    %v174 = vld [vmem:[#allocation11 + $0x8] sm:$0xff]
    %v175 = vld [vmem:[%s7] sm:$0x1]
    %v177 = vlaneseq
    %v178 = vshrl.u32 %v177, 7
    %v179 = vsub.s32 0, %v178
    %v180 = vrot.slane %v175, %v179
    %vm190 = vcmask 1041409
    %v191 = vsel %vm190, %v166, %v165
    %vm192 = vcmask 1042434
    %v193 = vsel %vm192, %v167, %v191
    %vm194 = vcmask 1043459
    %v195 = vsel %vm194, %v168, %v193
    %vm196 = vcmask 1044484
    %v197 = vsel %vm196, %v169, %v195
    %vm198 = vcmask 1045509
    %v199 = vsel %vm198, %v170, %v197
    %vm200 = vcmask 1046534
    %v201 = vsel %vm200, %v171, %v199
    %vm202 = vcmask 1047559
    %v203 = vsel %vm202, %v172, %v201
    %v204 = vsel %vm108, %v203, 0
    %206 = vmatprep.subr.mxu0 0.0
    %207 = vmatpush1.msra.mxu0 %v173
    %208 = vmatprep.subr.mxu0 0.0
    %209 = vmatpush1.msra.mxu0 %v174
    %210 = vmatprep.subr.mxu0 0.0
    %211 = vmatpush1.msra.mxu0 0.0
    %212 = vmatprep.subr.mxu0 0.0
    %213 = vmatpush1.msra.mxu0 0.0
    %214 = vmatprep.subr.mxu0 0.0
    %215 = vmatpush1.msra.mxu0 0.0
    %216 = vmatprep.subr.mxu0 0.0
    %217 = vmatpush1.msra.mxu0 0.0
    %218 = vmatprep.subr.mxu0 0.0
    %219 = vmatpush1.msra.mxu0 0.0
    %220 = vmatprep.subr.mxu0 0.0
    %221 = vmatpush1.msra.mxu0 0.0
    %222 = vmatprep.subr.mxu0 0.0
    %223 = vmatpush1.msra.mxu0 0.0
    %224 = vmatprep.subr.mxu0 0.0
    %225 = vmatpush1.msra.mxu0 0.0
    %226 = vmatprep.subr.mxu0 0.0
    %227 = vmatpush1.msra.mxu0 0.0
    %228 = vmatprep.subr.mxu0 0.0
    %229 = vmatpush1.msra.mxu0 0.0
    %230 = vmatprep.subr.mxu0 0.0
    %231 = vmatpush1.msra.mxu0 0.0
    %232 = vmatprep.subr.mxu0 0.0
    %233 = vmatpush1.msra.mxu0 0.0
    %234 = vmatprep.subr.mxu0 0.0
    %235 = vmatpush1.msra.mxu0 0.0
    %236 = vmatprep.subr.mxu0 0.0
    %237 = vmatpush1.msra.mxu0 0.0
    %238 = vmatprep.subr.mxu0 0.0
    %239 = vmatpush1.msra.mxu0 0.0
    %240 = vmatprep.subr.mxu0 0.0
    %241 = vmatpush1.msra.mxu0 0.0
    %242 = vmatprep.subr.mxu0 0.0
    %243 = vmatpush1.msra.mxu0 0.0
    %244 = vmatprep.subr.mxu0 0.0
    %245 = vmatpush1.msra.mxu0 0.0
    %246 = vmatprep.subr.mxu0 0.0
    %247 = vmatpush1.msra.mxu0 0.0
    %248 = vmatprep.subr.mxu0 0.0
    %249 = vmatpush1.msra.mxu0 0.0
    %250 = vmatprep.subr.mxu0 0.0
    %251 = vmatpush1.msra.mxu0 0.0
    %252 = vmatprep.subr.mxu0 0.0
    %253 = vmatpush1.msra.mxu0 0.0
    %254 = vmatprep.subr.mxu0 0.0
    %255 = vmatpush1.msra.mxu0 0.0
    %256 = vmatprep.subr.mxu0 0.0
    %257 = vmatpush1.msra.mxu0 0.0
    %258 = vmatprep.subr.mxu0 0.0
    %259 = vmatpush1.msra.mxu0 0.0
    %260 = vmatprep.subr.mxu0 0.0
    %261 = vmatpush1.msra.mxu0 0.0
    %262 = vmatprep.subr.mxu0 0.0
    %263 = vmatpush1.msra.mxu0 0.0
    %264 = vmatprep.subr.mxu0 0.0
    %265 = vmatpush1.msra.mxu0 0.0
    %266 = vmatprep.subr.mxu0 0.0
    %267 = vmatpush1.msra.mxu0 0.0
    %268 = vmatprep.subr.mxu0 0.0
    %269 = vmatpush1.msra.mxu0 0.0
    %270 = vmatprep.mubr.f32.mxu0 0.0
    %271 = vmatmul.mubr.f32.gmra.mrb[0].mxu0 %v204
    %v272 = vpop.f32.mrb[0].mxu0
    %v273 = vadd.f32 %v180, %v272
    %v274 = vpop.f32.mrb[0].mxu0
    %275 = vdwg.mxu0
    %v276 = vld [vmem:[%s8] sm:$0xff]
    %v277 = vld [vmem:[%s8 + $0x8] sm:$0xff]
    %v278 = vld [vmem:[%s9] sm:$0x1]
    %v280 = vlaneseq
    %v281 = vshrl.u32 %v280, 7
    %v282 = vsub.s32 0, %v281
    %v283 = vrot.slane %v278, %v282
    %285 = vmatprep.subr.mxu0 0.0
    %286 = vmatpush1.msra.mxu0 %v276
    %287 = vmatprep.subr.mxu0 0.0
    %288 = vmatpush1.msra.mxu0 %v277
    %289 = vmatprep.subr.mxu0 0.0
    %290 = vmatpush1.msra.mxu0 0.0
    %291 = vmatprep.subr.mxu0 0.0
    %292 = vmatpush1.msra.mxu0 0.0
    %293 = vmatprep.subr.mxu0 0.0
    %294 = vmatpush1.msra.mxu0 0.0
    %295 = vmatprep.subr.mxu0 0.0
    %296 = vmatpush1.msra.mxu0 0.0
    %297 = vmatprep.subr.mxu0 0.0
    %298 = vmatpush1.msra.mxu0 0.0
    %299 = vmatprep.subr.mxu0 0.0
    %300 = vmatpush1.msra.mxu0 0.0
    %301 = vmatprep.subr.mxu0 0.0
    %302 = vmatpush1.msra.mxu0 0.0
    %303 = vmatprep.subr.mxu0 0.0
    %304 = vmatpush1.msra.mxu0 0.0
    %305 = vmatprep.subr.mxu0 0.0
    %306 = vmatpush1.msra.mxu0 0.0
    %307 = vmatprep.subr.mxu0 0.0
    %308 = vmatpush1.msra.mxu0 0.0
    %309 = vmatprep.subr.mxu0 0.0
    %310 = vmatpush1.msra.mxu0 0.0
    %311 = vmatprep.subr.mxu0 0.0
    %312 = vmatpush1.msra.mxu0 0.0
    %313 = vmatprep.subr.mxu0 0.0
    %314 = vmatpush1.msra.mxu0 0.0
    %315 = vmatprep.subr.mxu0 0.0
    %316 = vmatpush1.msra.mxu0 0.0
    %317 = vmatprep.subr.mxu0 0.0
    %318 = vmatpush1.msra.mxu0 0.0
    %319 = vmatprep.subr.mxu0 0.0
    %320 = vmatpush1.msra.mxu0 0.0
    %321 = vmatprep.subr.mxu0 0.0
    %322 = vmatpush1.msra.mxu0 0.0
    %323 = vmatprep.subr.mxu0 0.0
    %324 = vmatpush1.msra.mxu0 0.0
    %325 = vmatprep.subr.mxu0 0.0
    %326 = vmatpush1.msra.mxu0 0.0
    %327 = vmatprep.subr.mxu0 0.0
    %328 = vmatpush1.msra.mxu0 0.0
    %329 = vmatprep.subr.mxu0 0.0
    %330 = vmatpush1.msra.mxu0 0.0
    %331 = vmatprep.subr.mxu0 0.0
    %332 = vmatpush1.msra.mxu0 0.0
    %333 = vmatprep.subr.mxu0 0.0
    %334 = vmatpush1.msra.mxu0 0.0
    %335 = vmatprep.subr.mxu0 0.0
    %336 = vmatpush1.msra.mxu0 0.0
    %337 = vmatprep.subr.mxu0 0.0
    %338 = vmatpush1.msra.mxu0 0.0
    %339 = vmatprep.subr.mxu0 0.0
    %340 = vmatpush1.msra.mxu0 0.0
    %341 = vmatprep.subr.mxu0 0.0
    %342 = vmatpush1.msra.mxu0 0.0
    %343 = vmatprep.subr.mxu0 0.0
    %344 = vmatpush1.msra.mxu0 0.0
    %345 = vmatprep.subr.mxu0 0.0
    %346 = vmatpush1.msra.mxu0 0.0
    %347 = vmatprep.subr.mxu0 0.0
    %348 = vmatpush1.msra.mxu0 0.0
    %349 = vmatprep.mubr.f32.mxu0 0.0
    %350 = vmatmul.mubr.f32.gmra.mrb[0].mxu0 %v204
    %v351 = vpop.f32.mrb[0].mxu0
    %v352 = vadd.f32 %v283, %v351
    %v353 = vpop.f32.mrb[0].mxu0
    %354 = vdwg.mxu0
    %v355 = vld [vmem:[%s1] sm:$0xff]
    %v356 = vld [vmem:[%s1 + $0x8] sm:$0xff]
    %v357 = vld [vmem:[%s1 + $0x10] sm:$0xff]
    %v358 = vld [vmem:[%s1 + $0x18] sm:$0xff]
    %v359 = vld [vmem:[%s1 + $0x20] sm:$0xff]
    %v360 = vld [vmem:[%s1 + $0x28] sm:$0xff]
    %v361 = vld [vmem:[#allocation6] sm:$0xff]
    %v362 = vld [vmem:[#allocation6 + $0x8] sm:$0xff]
    %v363 = vld [vmem:[#allocation6 + $0x10] sm:$0xff]
    %v364 = vld [vmem:[#allocation6 + $0x18] sm:$0xff]
    %vm365 = vcmask 64512
    %v367 = vsel %vm365, %v355, 0
    %v370 = vsel %vm365, %v356, 0
    %v373 = vsel %vm365, %v357, 0
    %v376 = vsel %vm365, %v358, 0
    %v379 = vsel %vm365, %v359, 0
    %v382 = vsel %vm365, %v360, 0
    %384 = vmatprep.subr.mxu0 %v362
    %385 = vmatpush1.msra.mxu0 %v361
    %386 = vmatprep.subr.mxu0 0.0
    %387 = vmatpush1.msra.mxu0 0.0
    %388 = vmatprep.subr.mxu0 0.0
    %389 = vmatpush1.msra.mxu0 0.0
    %390 = vmatprep.subr.mxu0 0.0
    %391 = vmatpush1.msra.mxu0 0.0
    %392 = vmatprep.subr.mxu0 0.0
    %393 = vmatpush1.msra.mxu0 0.0
    %394 = vmatprep.subr.mxu0 0.0
    %395 = vmatpush1.msra.mxu0 0.0
    %396 = vmatprep.subr.mxu0 0.0
    %397 = vmatpush1.msra.mxu0 0.0
    %398 = vmatprep.subr.mxu0 0.0
    %399 = vmatpush1.msra.mxu0 0.0
    %400 = vmatprep.subr.mxu0 0.0
    %401 = vmatpush1.msra.mxu0 0.0
    %402 = vmatprep.subr.mxu0 0.0
    %403 = vmatpush1.msra.mxu0 0.0
    %404 = vmatprep.subr.mxu0 0.0
    %405 = vmatpush1.msra.mxu0 0.0
    %406 = vmatprep.subr.mxu0 0.0
    %407 = vmatpush1.msra.mxu0 0.0
    %408 = vmatprep.subr.mxu0 0.0
    %409 = vmatpush1.msra.mxu0 0.0
    %410 = vmatprep.subr.mxu0 0.0
    %411 = vmatpush1.msra.mxu0 0.0
    %412 = vmatprep.subr.mxu0 0.0
    %413 = vmatpush1.msra.mxu0 0.0
    %414 = vmatprep.subr.mxu0 0.0
    %415 = vmatpush1.msra.mxu0 0.0
    %416 = vmatprep.subr.mxu0 0.0
    %417 = vmatpush1.msra.mxu0 0.0
    %418 = vmatprep.subr.mxu0 0.0
    %419 = vmatpush1.msra.mxu0 0.0
    %420 = vmatprep.subr.mxu0 0.0
    %421 = vmatpush1.msra.mxu0 0.0
    %422 = vmatprep.subr.mxu0 0.0
    %423 = vmatpush1.msra.mxu0 0.0
    %424 = vmatprep.subr.mxu0 0.0
    %425 = vmatpush1.msra.mxu0 0.0
    %426 = vmatprep.subr.mxu0 0.0
    %427 = vmatpush1.msra.mxu0 0.0
    %428 = vmatprep.subr.mxu0 0.0
    %429 = vmatpush1.msra.mxu0 0.0
    %430 = vmatprep.subr.mxu0 0.0
    %431 = vmatpush1.msra.mxu0 0.0
    %432 = vmatprep.subr.mxu0 0.0
    %433 = vmatpush1.msra.mxu0 0.0
    %434 = vmatprep.subr.mxu0 0.0
    %435 = vmatpush1.msra.mxu0 0.0
    %436 = vmatprep.subr.mxu0 0.0
    %437 = vmatpush1.msra.mxu0 0.0
    %438 = vmatprep.subr.mxu0 0.0
    %439 = vmatpush1.msra.mxu0 0.0
    %440 = vmatprep.subr.mxu0 0.0
    %441 = vmatpush1.msra.mxu0 0.0
    %442 = vmatprep.subr.mxu0 0.0
    %443 = vmatpush1.msra.mxu0 0.0
    %444 = vmatprep.subr.mxu0 0.0
    %445 = vmatpush1.msra.mxu0 0.0
    %446 = vmatprep.subr.mxu0 0.0
    %447 = vmatpush1.msra.mxu0 0.0
    %448 = vmatprep.mubr.f32.mxu0 0.0
    %449 = vmatmul.mubr.f32.gmra.mrb[0].mxu0 %v367
    %v450 = vpop.f32.mrb[0].mxu0
    %v451 = vadd.f32 0.0, %v450
    %v452 = vpop.f32.mrb[0].mxu0
    %v453 = vadd.f32 0.0, %v452
    %454 = vmatprep.mubr.f32.mxu0 0.0
    %455 = vmatmul.mubr.f32.gmra.mrb[0].mxu0 %v370
    %v456 = vpop.f32.mrb[0].mxu0
    %v457 = vadd.f32 0.0, %v456
    %v458 = vpop.f32.mrb[0].mxu0
    %v459 = vadd.f32 0.0, %v458
    %460 = vmatprep.mubr.f32.mxu0 0.0
    %461 = vmatmul.mubr.f32.gmra.mrb[0].mxu0 %v373
    %v462 = vpop.f32.mrb[0].mxu0
    %v463 = vadd.f32 0.0, %v462
    %v464 = vpop.f32.mrb[0].mxu0
    %v465 = vadd.f32 0.0, %v464
    %466 = vmatprep.mubr.f32.mxu0 0.0
    %467 = vmatmul.mubr.f32.gmra.mrb[0].mxu0 %v376
    %v468 = vpop.f32.mrb[0].mxu0
    %v469 = vadd.f32 0.0, %v468
    %v470 = vpop.f32.mrb[0].mxu0
    %v471 = vadd.f32 0.0, %v470
    %472 = vmatprep.mubr.f32.mxu0 0.0
    %473 = vmatmul.mubr.f32.gmra.mrb[0].mxu0 %v379
    %v474 = vpop.f32.mrb[0].mxu0
    %v475 = vadd.f32 0.0, %v474
    %v476 = vpop.f32.mrb[0].mxu0
    %v477 = vadd.f32 0.0, %v476
    %478 = vmatprep.mubr.f32.mxu0 0.0
    %479 = vmatmul.mubr.f32.gmra.mrb[0].mxu0 %v382
    %v480 = vpop.f32.mrb[0].mxu0
    %v481 = vadd.f32 0.0, %v480
    %v482 = vpop.f32.mrb[0].mxu0
    %v483 = vadd.f32 0.0, %v482
    %484 = vdwg.mxu0
    %485 = vmatprep.subr.mxu0 %v364
    %486 = vmatpush1.msra.mxu0 %v363
    %487 = vmatprep.subr.mxu0 0.0
    %488 = vmatpush1.msra.mxu0 0.0
    %489 = vmatprep.subr.mxu0 0.0
    %490 = vmatpush1.msra.mxu0 0.0
    %491 = vmatprep.subr.mxu0 0.0
    %492 = vmatpush1.msra.mxu0 0.0
    %493 = vmatprep.subr.mxu0 0.0
    %494 = vmatpush1.msra.mxu0 0.0
    %495 = vmatprep.subr.mxu0 0.0
    %496 = vmatpush1.msra.mxu0 0.0
    %497 = vmatprep.subr.mxu0 0.0
    %498 = vmatpush1.msra.mxu0 0.0
    %499 = vmatprep.subr.mxu0 0.0
    %500 = vmatpush1.msra.mxu0 0.0
    %501 = vmatprep.subr.mxu0 0.0
    %502 = vmatpush1.msra.mxu0 0.0
    %503 = vmatprep.subr.mxu0 0.0
    %504 = vmatpush1.msra.mxu0 0.0
    %505 = vmatprep.subr.mxu0 0.0
    %506 = vmatpush1.msra.mxu0 0.0
    %507 = vmatprep.subr.mxu0 0.0
    %508 = vmatpush1.msra.mxu0 0.0
    %509 = vmatprep.subr.mxu0 0.0
    %510 = vmatpush1.msra.mxu0 0.0
    %511 = vmatprep.subr.mxu0 0.0
    %512 = vmatpush1.msra.mxu0 0.0
    %513 = vmatprep.subr.mxu0 0.0
    %514 = vmatpush1.msra.mxu0 0.0
    %515 = vmatprep.subr.mxu0 0.0
    %516 = vmatpush1.msra.mxu0 0.0
    %517 = vmatprep.subr.mxu0 0.0
    %518 = vmatpush1.msra.mxu0 0.0
    %519 = vmatprep.subr.mxu0 0.0
    %520 = vmatpush1.msra.mxu0 0.0
    %521 = vmatprep.subr.mxu0 0.0
    %522 = vmatpush1.msra.mxu0 0.0
    %523 = vmatprep.subr.mxu0 0.0
    %524 = vmatpush1.msra.mxu0 0.0
    %525 = vmatprep.subr.mxu0 0.0
    %526 = vmatpush1.msra.mxu0 0.0
    %527 = vmatprep.subr.mxu0 0.0
    %528 = vmatpush1.msra.mxu0 0.0
    %529 = vmatprep.subr.mxu0 0.0
    %530 = vmatpush1.msra.mxu0 0.0
    %531 = vmatprep.subr.mxu0 0.0
    %532 = vmatpush1.msra.mxu0 0.0
    %533 = vmatprep.subr.mxu0 0.0
    %534 = vmatpush1.msra.mxu0 0.0
    %535 = vmatprep.subr.mxu0 0.0
    %536 = vmatpush1.msra.mxu0 0.0
    %537 = vmatprep.subr.mxu0 0.0
    %538 = vmatpush1.msra.mxu0 0.0
    %539 = vmatprep.subr.mxu0 0.0
    %540 = vmatpush1.msra.mxu0 0.0
    %541 = vmatprep.subr.mxu0 0.0
    %542 = vmatpush1.msra.mxu0 0.0
    %543 = vmatprep.subr.mxu0 0.0
    %544 = vmatpush1.msra.mxu0 0.0
    %545 = vmatprep.subr.mxu0 0.0
    %546 = vmatpush1.msra.mxu0 0.0
    %547 = vmatprep.subr.mxu0 0.0
    %548 = vmatpush1.msra.mxu0 0.0
    %549 = vmatprep.mubr.f32.mxu0 0.0
    %550 = vmatmul.mubr.f32.gmra.mrb[0].mxu0 %v367
    %v551 = vpop.f32.mrb[0].mxu0
    %v552 = vadd.f32 0.0, %v551
    %v553 = vpop.f32.mrb[0].mxu0
    %v554 = vadd.f32 0.0, %v553
    %555 = vmatprep.mubr.f32.mxu0 0.0
    %556 = vmatmul.mubr.f32.gmra.mrb[0].mxu0 %v370
    %v557 = vpop.f32.mrb[0].mxu0
    %v558 = vadd.f32 0.0, %v557
    %v559 = vpop.f32.mrb[0].mxu0
    %v560 = vadd.f32 0.0, %v559
    %561 = vmatprep.mubr.f32.mxu0 0.0
    %562 = vmatmul.mubr.f32.gmra.mrb[0].mxu0 %v373
    %v563 = vpop.f32.mrb[0].mxu0
    %v564 = vadd.f32 0.0, %v563
    %v565 = vpop.f32.mrb[0].mxu0
    %v566 = vadd.f32 0.0, %v565
    %567 = vmatprep.mubr.f32.mxu0 0.0
    %568 = vmatmul.mubr.f32.gmra.mrb[0].mxu0 %v376
    %v569 = vpop.f32.mrb[0].mxu0
    %v570 = vadd.f32 0.0, %v569
    %v571 = vpop.f32.mrb[0].mxu0
    %v572 = vadd.f32 0.0, %v571
    %573 = vmatprep.mubr.f32.mxu0 0.0
    %574 = vmatmul.mubr.f32.gmra.mrb[0].mxu0 %v379
    %v575 = vpop.f32.mrb[0].mxu0
    %v576 = vadd.f32 0.0, %v575
    %v577 = vpop.f32.mrb[0].mxu0
    %v578 = vadd.f32 0.0, %v577
    %579 = vmatprep.mubr.f32.mxu0 0.0
    %580 = vmatmul.mubr.f32.gmra.mrb[0].mxu0 %v382
    %v581 = vpop.f32.mrb[0].mxu0
    %v582 = vadd.f32 0.0, %v581
    %v583 = vpop.f32.mrb[0].mxu0
    %v584 = vadd.f32 0.0, %v583
    %585 = vdwg.mxu0
    %586 = vst [vmem:[#allocation2] sm:$0xff] %v451
    %587 = vst [vmem:[#allocation2 + $0x8] sm:$0xff] %v453
    %588 = vst [vmem:[#allocation2 + $0x10] sm:$0xff] %v552
    %589 = vst [vmem:[#allocation2 + $0x18] sm:$0xff] %v554
    %590 = vst [vmem:[#allocation2 + $0x20] sm:$0xff] %v457
    %591 = vst [vmem:[#allocation2 + $0x28] sm:$0xff] %v459
    %592 = vst [vmem:[#allocation2 + $0x30] sm:$0xff] %v558
    %593 = vst [vmem:[#allocation2 + $0x38] sm:$0xff] %v560
    %594 = vst [vmem:[#allocation2 + $0x40] sm:$0xff] %v463
    %595 = vst [vmem:[#allocation2 + $0x48] sm:$0xff] %v465
    %596 = vst [vmem:[#allocation2 + $0x50] sm:$0xff] %v564
    %597 = vst [vmem:[#allocation2 + $0x58] sm:$0xff] %v566
    %598 = vst [vmem:[#allocation2 + $0x60] sm:$0xff] %v469
    %599 = vst [vmem:[#allocation2 + $0x68] sm:$0xff] %v471
    %600 = vst [vmem:[#allocation2 + $0x70] sm:$0xff] %v570
    %601 = vst [vmem:[#allocation2 + $0x78] sm:$0xff] %v572
    %602 = vst [vmem:[#allocation2 + $0x80] sm:$0xff] %v475
    %603 = vst [vmem:[#allocation2 + $0x88] sm:$0xff] %v477
    %604 = vst [vmem:[#allocation2 + $0x90] sm:$0xff] %v576
    %605 = vst [vmem:[#allocation2 + $0x98] sm:$0xff] %v578
    %606 = vst [vmem:[#allocation2 + $0xa0] sm:$0xff] %v481
    %607 = vst [vmem:[#allocation2 + $0xa8] sm:$0xff] %v483
    %608 = vst [vmem:[#allocation2 + $0xb0] sm:$0xff] %v582
    %609 = vst [vmem:[#allocation2 + $0xb8] sm:$0xff] %v584
    %v610 = vld [vmem:[%s3] sm:$0xff]
    %v611 = vld [vmem:[%s3 + $0x8] sm:$0xff]
    %v612 = vld [vmem:[%s3 + $0x10] sm:$0xff]
    %v613 = vld [vmem:[%s3 + $0x18] sm:$0xff]
    %v614 = vld [vmem:[%s3 + $0x20] sm:$0xff]
    %v615 = vld [vmem:[%s3 + $0x28] sm:$0xff]
    %v616 = vld [vmem:[%s3 + $0x30] sm:$0xff]
    %v617 = vld [vmem:[%s3 + $0x38] sm:$0xff]
    %v618 = vld [vmem:[#allocation9] sm:$0xf]
    %v620 = vlaneseq
    %v621 = vshrl.u32 %v620, 7
    %v622 = vsub.s32 0, %v621
    %v623 = vrot.slane %v618, %v622
    %v624 = vlaneseq
    %v625 = vshrl.u32 %v624, 7
    %v626 = vsub.s32 1, %v625
    %v627 = vrot.slane %v618, %v626
    %v628 = vlaneseq
    %v629 = vshrl.u32 %v628, 7
    %v630 = vsub.s32 2, %v629
    %v631 = vrot.slane %v618, %v630
    %v632 = vlaneseq
    %v633 = vshrl.u32 %v632, 7
    %v634 = vsub.s32 3, %v633
    %v635 = vrot.slane %v618, %v634
    %v648 = vsel %vm190, %v122, %v115
    %v649 = vsel %vm192, %v129, %v648
    %v650 = vsel %vm194, %v136, %v649
    %v651 = vsel %vm196, %v143, %v650
    %v652 = vsel %vm198, %v150, %v651
    %v653 = vsel %vm200, %v157, %v652
    %v654 = vsel %vm202, %v164, %v653
    %v655 = vsel %vm108, %v654, 0
    %657 = vmatprep.subr.mxu0 %v611
    %658 = vmatpush1.msra.mxu0 %v610
    %659 = vmatprep.subr.mxu0 %v615
    %660 = vmatpush1.msra.mxu0 %v614
    %661 = vmatprep.subr.mxu0 0.0
    %662 = vmatpush1.msra.mxu0 0.0
    %663 = vmatprep.subr.mxu0 0.0
    %664 = vmatpush1.msra.mxu0 0.0
    %665 = vmatprep.subr.mxu0 0.0
    %666 = vmatpush1.msra.mxu0 0.0
    %667 = vmatprep.subr.mxu0 0.0
    %668 = vmatpush1.msra.mxu0 0.0
    %669 = vmatprep.subr.mxu0 0.0
    %670 = vmatpush1.msra.mxu0 0.0
    %671 = vmatprep.subr.mxu0 0.0
    %672 = vmatpush1.msra.mxu0 0.0
    %673 = vmatprep.subr.mxu0 0.0
    %674 = vmatpush1.msra.mxu0 0.0
    %675 = vmatprep.subr.mxu0 0.0
    %676 = vmatpush1.msra.mxu0 0.0
    %677 = vmatprep.subr.mxu0 0.0
    %678 = vmatpush1.msra.mxu0 0.0
    %679 = vmatprep.subr.mxu0 0.0
    %680 = vmatpush1.msra.mxu0 0.0
    %681 = vmatprep.subr.mxu0 0.0
    %682 = vmatpush1.msra.mxu0 0.0
    %683 = vmatprep.subr.mxu0 0.0
    %684 = vmatpush1.msra.mxu0 0.0
    %685 = vmatprep.subr.mxu0 0.0
    %686 = vmatpush1.msra.mxu0 0.0
    %687 = vmatprep.subr.mxu0 0.0
    %688 = vmatpush1.msra.mxu0 0.0
    %689 = vmatprep.subr.mxu0 0.0
    %690 = vmatpush1.msra.mxu0 0.0
    %691 = vmatprep.subr.mxu0 0.0
    %692 = vmatpush1.msra.mxu0 0.0
    %693 = vmatprep.subr.mxu0 0.0
    %694 = vmatpush1.msra.mxu0 0.0
    %695 = vmatprep.subr.mxu0 0.0
    %696 = vmatpush1.msra.mxu0 0.0
    %697 = vmatprep.subr.mxu0 0.0
    %698 = vmatpush1.msra.mxu0 0.0
    %699 = vmatprep.subr.mxu0 0.0
    %700 = vmatpush1.msra.mxu0 0.0
    %701 = vmatprep.subr.mxu0 0.0
    %702 = vmatpush1.msra.mxu0 0.0
    %703 = vmatprep.subr.mxu0 0.0
    %704 = vmatpush1.msra.mxu0 0.0
    %705 = vmatprep.subr.mxu0 0.0
    %706 = vmatpush1.msra.mxu0 0.0
    %707 = vmatprep.subr.mxu0 0.0
    %708 = vmatpush1.msra.mxu0 0.0
    %709 = vmatprep.subr.mxu0 0.0
    %710 = vmatpush1.msra.mxu0 0.0
    %711 = vmatprep.subr.mxu0 0.0
    %712 = vmatpush1.msra.mxu0 0.0
    %713 = vmatprep.subr.mxu0 0.0
    %714 = vmatpush1.msra.mxu0 0.0
    %715 = vmatprep.subr.mxu0 0.0
    %716 = vmatpush1.msra.mxu0 0.0
    %717 = vmatprep.subr.mxu0 0.0
    %718 = vmatpush1.msra.mxu0 0.0
    %719 = vmatprep.subr.mxu0 0.0
    %720 = vmatpush1.msra.mxu0 0.0
    %721 = vmatprep.mubr.f32.mxu0 0.0
    %722 = vmatmul.mubr.f32.gmra.mrb[0].mxu0 %v655
    %v723 = vpop.f32.mrb[0].mxu0
    %v724 = vadd.f32 %v623, %v723
    %v725 = vpop.f32.mrb[0].mxu0
    %v726 = vadd.f32 %v627, %v725
    %727 = vdwg.mxu0
    %728 = vmatprep.subr.mxu0 %v613
    %729 = vmatpush1.msra.mxu0 %v612
    %730 = vmatprep.subr.mxu0 %v617
    %731 = vmatpush1.msra.mxu0 %v616
    %732 = vmatprep.subr.mxu0 0.0
    %733 = vmatpush1.msra.mxu0 0.0
    %734 = vmatprep.subr.mxu0 0.0
    %735 = vmatpush1.msra.mxu0 0.0
    %736 = vmatprep.subr.mxu0 0.0
    %737 = vmatpush1.msra.mxu0 0.0
    %738 = vmatprep.subr.mxu0 0.0
    %739 = vmatpush1.msra.mxu0 0.0
    %740 = vmatprep.subr.mxu0 0.0
    %741 = vmatpush1.msra.mxu0 0.0
    %742 = vmatprep.subr.mxu0 0.0
    %743 = vmatpush1.msra.mxu0 0.0
    %744 = vmatprep.subr.mxu0 0.0
    %745 = vmatpush1.msra.mxu0 0.0
    %746 = vmatprep.subr.mxu0 0.0
    %747 = vmatpush1.msra.mxu0 0.0
    %748 = vmatprep.subr.mxu0 0.0
    %749 = vmatpush1.msra.mxu0 0.0
    %750 = vmatprep.subr.mxu0 0.0
    %751 = vmatpush1.msra.mxu0 0.0
    %752 = vmatprep.subr.mxu0 0.0
    %753 = vmatpush1.msra.mxu0 0.0
    %754 = vmatprep.subr.mxu0 0.0
    %755 = vmatpush1.msra.mxu0 0.0
    %756 = vmatprep.subr.mxu0 0.0
    %757 = vmatpush1.msra.mxu0 0.0
    %758 = vmatprep.subr.mxu0 0.0
    %759 = vmatpush1.msra.mxu0 0.0
    %760 = vmatprep.subr.mxu0 0.0
    %761 = vmatpush1.msra.mxu0 0.0
    %762 = vmatprep.subr.mxu0 0.0
    %763 = vmatpush1.msra.mxu0 0.0
    %764 = vmatprep.subr.mxu0 0.0
    %765 = vmatpush1.msra.mxu0 0.0
    %766 = vmatprep.subr.mxu0 0.0
    %767 = vmatpush1.msra.mxu0 0.0
    %768 = vmatprep.subr.mxu0 0.0
    %769 = vmatpush1.msra.mxu0 0.0
    %770 = vmatprep.subr.mxu0 0.0
    %771 = vmatpush1.msra.mxu0 0.0
    %772 = vmatprep.subr.mxu0 0.0
    %773 = vmatpush1.msra.mxu0 0.0
    %774 = vmatprep.subr.mxu0 0.0
    %775 = vmatpush1.msra.mxu0 0.0
    %776 = vmatprep.subr.mxu0 0.0
    %777 = vmatpush1.msra.mxu0 0.0
    %778 = vmatprep.subr.mxu0 0.0
    %779 = vmatpush1.msra.mxu0 0.0
    %780 = vmatprep.subr.mxu0 0.0
    %781 = vmatpush1.msra.mxu0 0.0
    %782 = vmatprep.subr.mxu0 0.0
    %783 = vmatpush1.msra.mxu0 0.0
    %784 = vmatprep.subr.mxu0 0.0
    %785 = vmatpush1.msra.mxu0 0.0
    %786 = vmatprep.subr.mxu0 0.0
    %787 = vmatpush1.msra.mxu0 0.0
    %788 = vmatprep.subr.mxu0 0.0
    %789 = vmatpush1.msra.mxu0 0.0
    %790 = vmatprep.subr.mxu0 0.0
    %791 = vmatpush1.msra.mxu0 0.0
    %792 = vmatprep.mubr.f32.mxu0 0.0
    %793 = vmatmul.mubr.f32.gmra.mrb[0].mxu0 %v655
    %v794 = vpop.f32.mrb[0].mxu0
    %v795 = vadd.f32 %v631, %v794
    %v796 = vpop.f32.mrb[0].mxu0
    %v797 = vadd.f32 %v635, %v796
    %798 = vdwg.mxu0
    %v799 = vld [vmem:[#allocation8] sm:$0xff]
    %v800 = vld [vmem:[#allocation8 + $0x8] sm:$0xff]
    %v801 = vld [vmem:[#allocation8 + $0x10] sm:$0xff]
    %v802 = vld [vmem:[#allocation8 + $0x18] sm:$0xff]
    %v803 = vld [vmem:[#allocation8 + $0x20] sm:$0xff]
    %v804 = vld [vmem:[#allocation8 + $0x28] sm:$0xff]
    %v805 = vld [vmem:[#allocation8 + $0x30] sm:$0xff]
    %v806 = vld [vmem:[#allocation8 + $0x38] sm:$0xff]
    %v807 = vld [vmem:[#allocation8 + $0x40] sm:$0xff]
    %v808 = vld [vmem:[#allocation8 + $0x48] sm:$0xff]
    %v809 = vld [vmem:[#allocation8 + $0x50] sm:$0xff]
    %v810 = vld [vmem:[#allocation8 + $0x58] sm:$0xff]
    %v811 = vld [vmem:[#allocation8 + $0x60] sm:$0xff]
    %v812 = vld [vmem:[#allocation8 + $0x68] sm:$0xff]
    %v813 = vld [vmem:[#allocation8 + $0x70] sm:$0xff]
    %v814 = vld [vmem:[#allocation8 + $0x78] sm:$0xff]
    %v815 = vld [vmem:[#allocation8 + $0x80] sm:$0xff]
    %v816 = vld [vmem:[#allocation8 + $0x88] sm:$0xff]
    %v817 = vld [vmem:[#allocation8 + $0x90] sm:$0xff]
    %v818 = vld [vmem:[#allocation8 + $0x98] sm:$0xff]
    %v819 = vld [vmem:[#allocation8 + $0xa0] sm:$0xff]
    %v820 = vld [vmem:[#allocation8 + $0xa8] sm:$0xff]
    %v821 = vld [vmem:[#allocation8 + $0xb0] sm:$0xff]
    %v822 = vld [vmem:[#allocation8 + $0xb8] sm:$0xff]
    %v823 = vld [vmem:[#allocation8 + $0xc0] sm:$0xff]
    %v824 = vld [vmem:[#allocation8 + $0xc8] sm:$0xff]
    %v825 = vld [vmem:[#allocation8 + $0xd0] sm:$0xff]
    %v826 = vld [vmem:[#allocation8 + $0xd8] sm:$0xff]
    %v827 = vld [vmem:[#allocation8 + $0xe0] sm:$0xff]
    %v828 = vld [vmem:[#allocation8 + $0xe8] sm:$0xff]
    %v829 = vld [vmem:[#allocation8 + $0xf0] sm:$0xff]
    %v830 = vld [vmem:[#allocation8 + $0xf8] sm:$0xff]
    %v831 = vld [vmem:[#allocation8 + $0x100] sm:$0xff]
    %v832 = vld [vmem:[#allocation8 + $0x108] sm:$0xff]
    %v833 = vld [vmem:[#allocation8 + $0x110] sm:$0xff]
    %v834 = vld [vmem:[#allocation8 + $0x118] sm:$0xff]
    %v835 = vld [vmem:[#allocation8 + $0x120] sm:$0xff]
    %v836 = vld [vmem:[#allocation8 + $0x128] sm:$0xff]
    %v837 = vld [vmem:[#allocation8 + $0x130] sm:$0xff]
    %v838 = vld [vmem:[#allocation8 + $0x138] sm:$0xff]
    %v839 = vld [vmem:[#allocation8 + $0x140] sm:$0xff]
    %v840 = vld [vmem:[#allocation8 + $0x148] sm:$0xff]
    %v841 = vld [vmem:[#allocation8 + $0x150] sm:$0xff]
    %v842 = vld [vmem:[#allocation8 + $0x158] sm:$0xff]
    %v843 = vld [vmem:[#allocation8 + $0x160] sm:$0xff]
    %v844 = vld [vmem:[#allocation8 + $0x168] sm:$0xff]
    %v845 = vld [vmem:[#allocation8 + $0x170] sm:$0xff]
    %v846 = vld [vmem:[#allocation8 + $0x178] sm:$0xff]
    %v847 = vld [vmem:[#allocation8 + $0x180] sm:$0xff]
    %v848 = vld [vmem:[#allocation8 + $0x188] sm:$0xff]
    %v849 = vld [vmem:[#allocation8 + $0x190] sm:$0xff]
    %v850 = vld [vmem:[#allocation8 + $0x198] sm:$0xff]
    %v851 = vld [vmem:[#allocation8 + $0x1a0] sm:$0xff]
    %v852 = vld [vmem:[#allocation8 + $0x1a8] sm:$0xff]
    %v853 = vld [vmem:[#allocation8 + $0x1b0] sm:$0xff]
    %v854 = vld [vmem:[#allocation8 + $0x1b8] sm:$0xff]
    %v855 = vld [vmem:[#allocation8 + $0x1c0] sm:$0xff]
    %v856 = vld [vmem:[#allocation8 + $0x1c8] sm:$0xff]
    %v857 = vld [vmem:[#allocation8 + $0x1d0] sm:$0xff]
    %v858 = vld [vmem:[#allocation8 + $0x1d8] sm:$0xff]
    %v859 = vld [vmem:[#allocation8 + $0x1e0] sm:$0xff]
    %v860 = vld [vmem:[#allocation8 + $0x1e8] sm:$0xff]
    %v861 = vld [vmem:[#allocation8 + $0x1f0] sm:$0xff]
    %v862 = vld [vmem:[#allocation8 + $0x1f8] sm:$0xff]
    %s863 = smul.u32 0, 4
    %s864 = smul.addr %s863, 8
    %s865 = scalar_lea.vmem [#allocation2], %s864
    %v866 = vld [vmem:[%s865] sm:$0xff]
    %v867 = vld [vmem:[%s865 + $0x8] sm:$0xff]
    %v868 = vld [vmem:[%s865 + $0x10] sm:$0xff]
    %v869 = vld [vmem:[%s865 + $0x18] sm:$0xff]
    %v870 = vadd.f32 %v866, %v724
    %v871 = vadd.f32 %v867, %v726
    %v872 = vadd.f32 %v868, %v795
    %v873 = vadd.f32 %v869, %v797
    %874 = vmatprep.subr.mxu0 %v800
    %875 = vmatpush1.msra.mxu0 %v799
    %876 = vmatprep.subr.mxu0 %v804
    %877 = vmatpush1.msra.mxu0 %v803
    %878 = vmatprep.subr.mxu0 %v808
    %879 = vmatpush1.msra.mxu0 %v807
    %880 = vmatprep.subr.mxu0 %v812
    %881 = vmatpush1.msra.mxu0 %v811
    %882 = vmatprep.subr.mxu0 %v816
    %883 = vmatpush1.msra.mxu0 %v815
    %884 = vmatprep.subr.mxu0 %v820
    %885 = vmatpush1.msra.mxu0 %v819
    %886 = vmatprep.subr.mxu0 %v824
    %887 = vmatpush1.msra.mxu0 %v823
    %888 = vmatprep.subr.mxu0 %v828
    %889 = vmatpush1.msra.mxu0 %v827
    %890 = vmatprep.subr.mxu0 %v832
    %891 = vmatpush1.msra.mxu0 %v831
    %892 = vmatprep.subr.mxu0 %v836
    %893 = vmatpush1.msra.mxu0 %v835
    %894 = vmatprep.subr.mxu0 %v840
    %895 = vmatpush1.msra.mxu0 %v839
    %896 = vmatprep.subr.mxu0 %v844
    %897 = vmatpush1.msra.mxu0 %v843
    %898 = vmatprep.subr.mxu0 %v848
    %899 = vmatpush1.msra.mxu0 %v847
    %900 = vmatprep.subr.mxu0 %v852
    %901 = vmatpush1.msra.mxu0 %v851
    %902 = vmatprep.subr.mxu0 %v856
    %903 = vmatpush1.msra.mxu0 %v855
    %904 = vmatprep.subr.mxu0 %v860
    %905 = vmatpush1.msra.mxu0 %v859
    %906 = vmatprep.subr.mxu0 0.0
    %907 = vmatpush1.msra.mxu0 0.0
    %908 = vmatprep.subr.mxu0 0.0
    %909 = vmatpush1.msra.mxu0 0.0
    %910 = vmatprep.subr.mxu0 0.0
    %911 = vmatpush1.msra.mxu0 0.0
    %912 = vmatprep.subr.mxu0 0.0
    %913 = vmatpush1.msra.mxu0 0.0
    %914 = vmatprep.subr.mxu0 0.0
    %915 = vmatpush1.msra.mxu0 0.0
    %916 = vmatprep.subr.mxu0 0.0
    %917 = vmatpush1.msra.mxu0 0.0
    %918 = vmatprep.subr.mxu0 0.0
    %919 = vmatpush1.msra.mxu0 0.0
    %920 = vmatprep.subr.mxu0 0.0
    %921 = vmatpush1.msra.mxu0 0.0
    %922 = vmatprep.subr.mxu0 0.0
    %923 = vmatpush1.msra.mxu0 0.0
    %924 = vmatprep.subr.mxu0 0.0
    %925 = vmatpush1.msra.mxu0 0.0
    %926 = vmatprep.subr.mxu0 0.0
    %927 = vmatpush1.msra.mxu0 0.0
    %928 = vmatprep.subr.mxu0 0.0
    %929 = vmatpush1.msra.mxu0 0.0
    %930 = vmatprep.subr.mxu0 0.0
    %931 = vmatpush1.msra.mxu0 0.0
    %932 = vmatprep.subr.mxu0 0.0
    %933 = vmatpush1.msra.mxu0 0.0
    %934 = vmatprep.subr.mxu0 0.0
    %935 = vmatpush1.msra.mxu0 0.0
    %936 = vmatprep.subr.mxu0 0.0
    %937 = vmatpush1.msra.mxu0 0.0
    %938 = vmatprep.mubr.f32.mxu0 0.0
    %939 = vmatmul.mubr.f32.gmra.mrb[0].mxu0 %v273
    %v940 = vpop.f32.mrb[0].mxu0
    %v941 = vadd.f32 0.0, %v940
    %v942 = vpop.f32.mrb[0].mxu0
    %v943 = vadd.f32 0.0, %v942
    %944 = vdwg.mxu0
    %945 = vmatprep.subr.mxu0 %v802
    %946 = vmatpush1.msra.mxu0 %v801
    %947 = vmatprep.subr.mxu0 %v806
    %948 = vmatpush1.msra.mxu0 %v805
    %949 = vmatprep.subr.mxu0 %v810
    %950 = vmatpush1.msra.mxu0 %v809
    %951 = vmatprep.subr.mxu0 %v814
    %952 = vmatpush1.msra.mxu0 %v813
    %953 = vmatprep.subr.mxu0 %v818
    %954 = vmatpush1.msra.mxu0 %v817
    %955 = vmatprep.subr.mxu0 %v822
    %956 = vmatpush1.msra.mxu0 %v821
    %957 = vmatprep.subr.mxu0 %v826
    %958 = vmatpush1.msra.mxu0 %v825
    %959 = vmatprep.subr.mxu0 %v830
    %960 = vmatpush1.msra.mxu0 %v829
    %961 = vmatprep.subr.mxu0 %v834
    %962 = vmatpush1.msra.mxu0 %v833
    %963 = vmatprep.subr.mxu0 %v838
    %964 = vmatpush1.msra.mxu0 %v837
    %965 = vmatprep.subr.mxu0 %v842
    %966 = vmatpush1.msra.mxu0 %v841
    %967 = vmatprep.subr.mxu0 %v846
    %968 = vmatpush1.msra.mxu0 %v845
    %969 = vmatprep.subr.mxu0 %v850
    %970 = vmatpush1.msra.mxu0 %v849
    %971 = vmatprep.subr.mxu0 %v854
    %972 = vmatpush1.msra.mxu0 %v853
    %973 = vmatprep.subr.mxu0 %v858
    %974 = vmatpush1.msra.mxu0 %v857
    %975 = vmatprep.subr.mxu0 %v862
    %976 = vmatpush1.msra.mxu0 %v861
    %977 = vmatprep.subr.mxu0 0.0
    %978 = vmatpush1.msra.mxu0 0.0
    %979 = vmatprep.subr.mxu0 0.0
    %980 = vmatpush1.msra.mxu0 0.0
    %981 = vmatprep.subr.mxu0 0.0
    %982 = vmatpush1.msra.mxu0 0.0
    %983 = vmatprep.subr.mxu0 0.0
    %984 = vmatpush1.msra.mxu0 0.0
    %985 = vmatprep.subr.mxu0 0.0
    %986 = vmatpush1.msra.mxu0 0.0
    %987 = vmatprep.subr.mxu0 0.0
    %988 = vmatpush1.msra.mxu0 0.0
    %989 = vmatprep.subr.mxu0 0.0
    %990 = vmatpush1.msra.mxu0 0.0
    %991 = vmatprep.subr.mxu0 0.0
    %992 = vmatpush1.msra.mxu0 0.0
    %993 = vmatprep.subr.mxu0 0.0
    %994 = vmatpush1.msra.mxu0 0.0
    %995 = vmatprep.subr.mxu0 0.0
    %996 = vmatpush1.msra.mxu0 0.0
    %997 = vmatprep.subr.mxu0 0.0
    %998 = vmatpush1.msra.mxu0 0.0
    %999 = vmatprep.subr.mxu0 0.0
    %1000 = vmatpush1.msra.mxu0 0.0
    %1001 = vmatprep.subr.mxu0 0.0
    %1002 = vmatpush1.msra.mxu0 0.0
    %1003 = vmatprep.subr.mxu0 0.0
    %1004 = vmatpush1.msra.mxu0 0.0
    %1005 = vmatprep.subr.mxu0 0.0
    %1006 = vmatpush1.msra.mxu0 0.0
    %1007 = vmatprep.subr.mxu0 0.0
    %1008 = vmatpush1.msra.mxu0 0.0
    %1009 = vmatprep.mubr.f32.mxu0 0.0
    %1010 = vmatmul.mubr.f32.gmra.mrb[0].mxu0 %v273
    %v1011 = vpop.f32.mrb[0].mxu0
    %v1012 = vadd.f32 0.0, %v1011
    %v1013 = vpop.f32.mrb[0].mxu0
    %v1014 = vadd.f32 0.0, %v1013
    %1015 = vdwg.mxu0
    %v1016 = vadd.f32 %v870, %v941
    %v1017 = vadd.f32 %v871, %v943
    %v1018 = vadd.f32 %v872, %v1012
    %v1019 = vadd.f32 %v873, %v1014
    %v1020 = vxor.u32 %v1016, 2147483648
    %v1021 = vmul.f32 %v1020, 1.442695
    %v1022 = vpow.pop %v1021
    %v1023 = vadd.f32 %v1022, 1.0
    %v1024 = vrcp.pop %v1023
    %v1025 = vmul.f32 1.0, %v1024
    %v1026 = vxor.u32 %v1017, 2147483648
    %v1027 = vmul.f32 %v1026, 1.442695
    %v1028 = vpow.pop %v1027
    %v1029 = vadd.f32 %v1028, 1.0
    %v1030 = vrcp.pop %v1029
    %v1031 = vmul.f32 1.0, %v1030
    %v1032 = vtanh.pop %v1018
    %v1033 = vxor.u32 %v1019, 2147483648
    %v1034 = vmul.f32 %v1033, 1.442695
    %v1035 = vpow.pop %v1034
    %v1036 = vadd.f32 %v1035, 1.0
    %v1037 = vrcp.pop %v1036
    %v1038 = vmul.f32 1.0, %v1037
    %v1039 = vmul.f32 %v1031, %v352
    %v1040 = vmul.f32 %v1025, %v1032
    %v1041 = vadd.f32 %v1039, %v1040
    %v1042 = vtanh.pop %v1041
    %v1043 = vmul.f32 %v1038, %v1042
    %1044 = vst [vmem:[#allocation12] sm:$0xff] %v1043
    %s1045 = smul.u32 1, 4
    %s1046 = smul.addr %s1045, 8
    %s1047 = scalar_lea.vmem [#allocation2], %s1046
    %v1048 = vld [vmem:[%s1047] sm:$0xff]
    %v1049 = vld [vmem:[%s1047 + $0x8] sm:$0xff]
    %v1050 = vld [vmem:[%s1047 + $0x10] sm:$0xff]
    %v1051 = vld [vmem:[%s1047 + $0x18] sm:$0xff]
    %v1052 = vadd.f32 %v1048, %v724
    %v1053 = vadd.f32 %v1049, %v726
    %v1054 = vadd.f32 %v1050, %v795
    %v1055 = vadd.f32 %v1051, %v797
    %1056 = vmatprep.subr.mxu0 %v800
    %1057 = vmatpush1.msra.mxu0 %v799
    %1058 = vmatprep.subr.mxu0 %v804
    %1059 = vmatpush1.msra.mxu0 %v803
    %1060 = vmatprep.subr.mxu0 %v808
    %1061 = vmatpush1.msra.mxu0 %v807
    %1062 = vmatprep.subr.mxu0 %v812
    %1063 = vmatpush1.msra.mxu0 %v811
    %1064 = vmatprep.subr.mxu0 %v816
    %1065 = vmatpush1.msra.mxu0 %v815
    %1066 = vmatprep.subr.mxu0 %v820
    %1067 = vmatpush1.msra.mxu0 %v819
    %1068 = vmatprep.subr.mxu0 %v824
    %1069 = vmatpush1.msra.mxu0 %v823
    %1070 = vmatprep.subr.mxu0 %v828
    %1071 = vmatpush1.msra.mxu0 %v827
    %1072 = vmatprep.subr.mxu0 %v832
    %1073 = vmatpush1.msra.mxu0 %v831
    %1074 = vmatprep.subr.mxu0 %v836
    %1075 = vmatpush1.msra.mxu0 %v835
    %1076 = vmatprep.subr.mxu0 %v840
    %1077 = vmatpush1.msra.mxu0 %v839
    %1078 = vmatprep.subr.mxu0 %v844
    %1079 = vmatpush1.msra.mxu0 %v843
    %1080 = vmatprep.subr.mxu0 %v848
    %1081 = vmatpush1.msra.mxu0 %v847
    %1082 = vmatprep.subr.mxu0 %v852
    %1083 = vmatpush1.msra.mxu0 %v851
    %1084 = vmatprep.subr.mxu0 %v856
    %1085 = vmatpush1.msra.mxu0 %v855
    %1086 = vmatprep.subr.mxu0 %v860
    %1087 = vmatpush1.msra.mxu0 %v859
    %1088 = vmatprep.subr.mxu0 0.0
    %1089 = vmatpush1.msra.mxu0 0.0
    %1090 = vmatprep.subr.mxu0 0.0
    %1091 = vmatpush1.msra.mxu0 0.0
    %1092 = vmatprep.subr.mxu0 0.0
    %1093 = vmatpush1.msra.mxu0 0.0
    %1094 = vmatprep.subr.mxu0 0.0
    %1095 = vmatpush1.msra.mxu0 0.0
    %1096 = vmatprep.subr.mxu0 0.0
    %1097 = vmatpush1.msra.mxu0 0.0
    %1098 = vmatprep.subr.mxu0 0.0
    %1099 = vmatpush1.msra.mxu0 0.0
    %1100 = vmatprep.subr.mxu0 0.0
    %1101 = vmatpush1.msra.mxu0 0.0
    %1102 = vmatprep.subr.mxu0 0.0
    %1103 = vmatpush1.msra.mxu0 0.0
    %1104 = vmatprep.subr.mxu0 0.0
    %1105 = vmatpush1.msra.mxu0 0.0
    %1106 = vmatprep.subr.mxu0 0.0
    %1107 = vmatpush1.msra.mxu0 0.0
    %1108 = vmatprep.subr.mxu0 0.0
    %1109 = vmatpush1.msra.mxu0 0.0
    %1110 = vmatprep.subr.mxu0 0.0
    %1111 = vmatpush1.msra.mxu0 0.0
    %1112 = vmatprep.subr.mxu0 0.0
    %1113 = vmatpush1.msra.mxu0 0.0
    %1114 = vmatprep.subr.mxu0 0.0
    %1115 = vmatpush1.msra.mxu0 0.0
    %1116 = vmatprep.subr.mxu0 0.0
    %1117 = vmatpush1.msra.mxu0 0.0
    %1118 = vmatprep.subr.mxu0 0.0
    %1119 = vmatpush1.msra.mxu0 0.0
    %1120 = vmatprep.mubr.f32.mxu0 0.0
    %1121 = vmatmul.mubr.f32.gmra.mrb[0].mxu0 %v1043
    %v1122 = vpop.f32.mrb[0].mxu0
    %v1123 = vadd.f32 0.0, %v1122
    %v1124 = vpop.f32.mrb[0].mxu0
    %v1125 = vadd.f32 0.0, %v1124
    %1126 = vdwg.mxu0
    %1127 = vmatprep.subr.mxu0 %v802
    %1128 = vmatpush1.msra.mxu0 %v801
    %1129 = vmatprep.subr.mxu0 %v806
    %1130 = vmatpush1.msra.mxu0 %v805
    %1131 = vmatprep.subr.mxu0 %v810
    %1132 = vmatpush1.msra.mxu0 %v809
    %1133 = vmatprep.subr.mxu0 %v814
    %1134 = vmatpush1.msra.mxu0 %v813
    %1135 = vmatprep.subr.mxu0 %v818
    %1136 = vmatpush1.msra.mxu0 %v817
    %1137 = vmatprep.subr.mxu0 %v822
    %1138 = vmatpush1.msra.mxu0 %v821
    %1139 = vmatprep.subr.mxu0 %v826
    %1140 = vmatpush1.msra.mxu0 %v825
    %1141 = vmatprep.subr.mxu0 %v830
    %1142 = vmatpush1.msra.mxu0 %v829
    %1143 = vmatprep.subr.mxu0 %v834
    %1144 = vmatpush1.msra.mxu0 %v833
    %1145 = vmatprep.subr.mxu0 %v838
    %1146 = vmatpush1.msra.mxu0 %v837
    %1147 = vmatprep.subr.mxu0 %v842
    %1148 = vmatpush1.msra.mxu0 %v841
    %1149 = vmatprep.subr.mxu0 %v846
    %1150 = vmatpush1.msra.mxu0 %v845
    %1151 = vmatprep.subr.mxu0 %v850
    %1152 = vmatpush1.msra.mxu0 %v849
    %1153 = vmatprep.subr.mxu0 %v854
    %1154 = vmatpush1.msra.mxu0 %v853
    %1155 = vmatprep.subr.mxu0 %v858
    %1156 = vmatpush1.msra.mxu0 %v857
    %1157 = vmatprep.subr.mxu0 %v862
    %1158 = vmatpush1.msra.mxu0 %v861
    %1159 = vmatprep.subr.mxu0 0.0
    %1160 = vmatpush1.msra.mxu0 0.0
    %1161 = vmatprep.subr.mxu0 0.0
    %1162 = vmatpush1.msra.mxu0 0.0
    %1163 = vmatprep.subr.mxu0 0.0
    %1164 = vmatpush1.msra.mxu0 0.0
    %1165 = vmatprep.subr.mxu0 0.0
    %1166 = vmatpush1.msra.mxu0 0.0
    %1167 = vmatprep.subr.mxu0 0.0
    %1168 = vmatpush1.msra.mxu0 0.0
    %1169 = vmatprep.subr.mxu0 0.0
    %1170 = vmatpush1.msra.mxu0 0.0
    %1171 = vmatprep.subr.mxu0 0.0
    %1172 = vmatpush1.msra.mxu0 0.0
    %1173 = vmatprep.subr.mxu0 0.0
    %1174 = vmatpush1.msra.mxu0 0.0
    %1175 = vmatprep.subr.mxu0 0.0
    %1176 = vmatpush1.msra.mxu0 0.0
    %1177 = vmatprep.subr.mxu0 0.0
    %1178 = vmatpush1.msra.mxu0 0.0
    %1179 = vmatprep.subr.mxu0 0.0
    %1180 = vmatpush1.msra.mxu0 0.0
    %1181 = vmatprep.subr.mxu0 0.0
    %1182 = vmatpush1.msra.mxu0 0.0
    %1183 = vmatprep.subr.mxu0 0.0
    %1184 = vmatpush1.msra.mxu0 0.0
    %1185 = vmatprep.subr.mxu0 0.0
    %1186 = vmatpush1.msra.mxu0 0.0
    %1187 = vmatprep.subr.mxu0 0.0
    %1188 = vmatpush1.msra.mxu0 0.0
    %1189 = vmatprep.subr.mxu0 0.0
    %1190 = vmatpush1.msra.mxu0 0.0
    %1191 = vmatprep.mubr.f32.mxu0 0.0
    %1192 = vmatmul.mubr.f32.gmra.mrb[0].mxu0 %v1043
    %v1193 = vpop.f32.mrb[0].mxu0
    %v1194 = vadd.f32 0.0, %v1193
    %v1195 = vpop.f32.mrb[0].mxu0
    %v1196 = vadd.f32 0.0, %v1195
    %1197 = vdwg.mxu0
    %v1198 = vadd.f32 %v1052, %v1123
    %v1199 = vadd.f32 %v1053, %v1125
    %v1200 = vadd.f32 %v1054, %v1194
    %v1201 = vadd.f32 %v1055, %v1196
    %v1202 = vxor.u32 %v1198, 2147483648
    %v1203 = vmul.f32 %v1202, 1.442695
    %v1204 = vpow.pop %v1203
    %v1205 = vadd.f32 %v1204, 1.0
    %v1206 = vrcp.pop %v1205
    %v1207 = vmul.f32 1.0, %v1206
    %v1208 = vxor.u32 %v1199, 2147483648
    %v1209 = vmul.f32 %v1208, 1.442695
    %v1210 = vpow.pop %v1209
    %v1211 = vadd.f32 %v1210, 1.0
    %v1212 = vrcp.pop %v1211
    %v1213 = vmul.f32 1.0, %v1212
    %v1214 = vtanh.pop %v1200
    %v1215 = vxor.u32 %v1201, 2147483648
    %v1216 = vmul.f32 %v1215, 1.442695
    %v1217 = vpow.pop %v1216
    %v1218 = vadd.f32 %v1217, 1.0
    %v1219 = vrcp.pop %v1218
    %v1220 = vmul.f32 1.0, %v1219
    %v1221 = vmul.f32 %v1213, %v1041
    %v1222 = vmul.f32 %v1207, %v1214
    %v1223 = vadd.f32 %v1221, %v1222
    %v1224 = vtanh.pop %v1223
    %v1225 = vmul.f32 %v1220, %v1224
    %s1226 = scalar_lea.vmem [#allocation12], 8
    %1227 = vst [vmem:[%s1226] sm:$0xff] %v1225
    %s1228 = smul.u32 2, 4
    %s1229 = smul.addr %s1228, 8
    %s1230 = scalar_lea.vmem [#allocation2], %s1229
    %v1231 = vld [vmem:[%s1230] sm:$0xff]
    %v1232 = vld [vmem:[%s1230 + $0x8] sm:$0xff]
    %v1233 = vld [vmem:[%s1230 + $0x10] sm:$0xff]
    %v1234 = vld [vmem:[%s1230 + $0x18] sm:$0xff]
    %v1235 = vadd.f32 %v1231, %v724
    %v1236 = vadd.f32 %v1232, %v726
    %v1237 = vadd.f32 %v1233, %v795
    %v1238 = vadd.f32 %v1234, %v797
    %1239 = vmatprep.subr.mxu0 %v800
    %1240 = vmatpush1.msra.mxu0 %v799
    %1241 = vmatprep.subr.mxu0 %v804
    %1242 = vmatpush1.msra.mxu0 %v803
    %1243 = vmatprep.subr.mxu0 %v808
    %1244 = vmatpush1.msra.mxu0 %v807
    %1245 = vmatprep.subr.mxu0 %v812
    %1246 = vmatpush1.msra.mxu0 %v811
    %1247 = vmatprep.subr.mxu0 %v816
    %1248 = vmatpush1.msra.mxu0 %v815
    %1249 = vmatprep.subr.mxu0 %v820
    %1250 = vmatpush1.msra.mxu0 %v819
    %1251 = vmatprep.subr.mxu0 %v824
    %1252 = vmatpush1.msra.mxu0 %v823
    %1253 = vmatprep.subr.mxu0 %v828
    %1254 = vmatpush1.msra.mxu0 %v827
    %1255 = vmatprep.subr.mxu0 %v832
    %1256 = vmatpush1.msra.mxu0 %v831
    %1257 = vmatprep.subr.mxu0 %v836
    %1258 = vmatpush1.msra.mxu0 %v835
    %1259 = vmatprep.subr.mxu0 %v840
    %1260 = vmatpush1.msra.mxu0 %v839
    %1261 = vmatprep.subr.mxu0 %v844
    %1262 = vmatpush1.msra.mxu0 %v843
    %1263 = vmatprep.subr.mxu0 %v848
    %1264 = vmatpush1.msra.mxu0 %v847
    %1265 = vmatprep.subr.mxu0 %v852
    %1266 = vmatpush1.msra.mxu0 %v851
    %1267 = vmatprep.subr.mxu0 %v856
    %1268 = vmatpush1.msra.mxu0 %v855
    %1269 = vmatprep.subr.mxu0 %v860
    %1270 = vmatpush1.msra.mxu0 %v859
    %1271 = vmatprep.subr.mxu0 0.0
    %1272 = vmatpush1.msra.mxu0 0.0
    %1273 = vmatprep.subr.mxu0 0.0
    %1274 = vmatpush1.msra.mxu0 0.0
    %1275 = vmatprep.subr.mxu0 0.0
    %1276 = vmatpush1.msra.mxu0 0.0
    %1277 = vmatprep.subr.mxu0 0.0
    %1278 = vmatpush1.msra.mxu0 0.0
    %1279 = vmatprep.subr.mxu0 0.0
    %1280 = vmatpush1.msra.mxu0 0.0
    %1281 = vmatprep.subr.mxu0 0.0
    %1282 = vmatpush1.msra.mxu0 0.0
    %1283 = vmatprep.subr.mxu0 0.0
    %1284 = vmatpush1.msra.mxu0 0.0
    %1285 = vmatprep.subr.mxu0 0.0
    %1286 = vmatpush1.msra.mxu0 0.0
    %1287 = vmatprep.subr.mxu0 0.0
    %1288 = vmatpush1.msra.mxu0 0.0
    %1289 = vmatprep.subr.mxu0 0.0
    %1290 = vmatpush1.msra.mxu0 0.0
    %1291 = vmatprep.subr.mxu0 0.0
    %1292 = vmatpush1.msra.mxu0 0.0
    %1293 = vmatprep.subr.mxu0 0.0
    %1294 = vmatpush1.msra.mxu0 0.0
    %1295 = vmatprep.subr.mxu0 0.0
    %1296 = vmatpush1.msra.mxu0 0.0
    %1297 = vmatprep.subr.mxu0 0.0
    %1298 = vmatpush1.msra.mxu0 0.0
    %1299 = vmatprep.subr.mxu0 0.0
    %1300 = vmatpush1.msra.mxu0 0.0
    %1301 = vmatprep.subr.mxu0 0.0
    %1302 = vmatpush1.msra.mxu0 0.0
    %1303 = vmatprep.mubr.f32.mxu0 0.0
    %1304 = vmatmul.mubr.f32.gmra.mrb[0].mxu0 %v1225
    %v1305 = vpop.f32.mrb[0].mxu0
    %v1306 = vadd.f32 0.0, %v1305
    %v1307 = vpop.f32.mrb[0].mxu0
    %v1308 = vadd.f32 0.0, %v1307
    %1309 = vdwg.mxu0
    %1310 = vmatprep.subr.mxu0 %v802
    %1311 = vmatpush1.msra.mxu0 %v801
    %1312 = vmatprep.subr.mxu0 %v806
    %1313 = vmatpush1.msra.mxu0 %v805
    %1314 = vmatprep.subr.mxu0 %v810
    %1315 = vmatpush1.msra.mxu0 %v809
    %1316 = vmatprep.subr.mxu0 %v814
    %1317 = vmatpush1.msra.mxu0 %v813
    %1318 = vmatprep.subr.mxu0 %v818
    %1319 = vmatpush1.msra.mxu0 %v817
    %1320 = vmatprep.subr.mxu0 %v822
    %1321 = vmatpush1.msra.mxu0 %v821
    %1322 = vmatprep.subr.mxu0 %v826
    %1323 = vmatpush1.msra.mxu0 %v825
    %1324 = vmatprep.subr.mxu0 %v830
    %1325 = vmatpush1.msra.mxu0 %v829
    %1326 = vmatprep.subr.mxu0 %v834
    %1327 = vmatpush1.msra.mxu0 %v833
    %1328 = vmatprep.subr.mxu0 %v838
    %1329 = vmatpush1.msra.mxu0 %v837
    %1330 = vmatprep.subr.mxu0 %v842
    %1331 = vmatpush1.msra.mxu0 %v841
    %1332 = vmatprep.subr.mxu0 %v846
    %1333 = vmatpush1.msra.mxu0 %v845
    %1334 = vmatprep.subr.mxu0 %v850
    %1335 = vmatpush1.msra.mxu0 %v849
    %1336 = vmatprep.subr.mxu0 %v854
    %1337 = vmatpush1.msra.mxu0 %v853
    %1338 = vmatprep.subr.mxu0 %v858
    %1339 = vmatpush1.msra.mxu0 %v857
    %1340 = vmatprep.subr.mxu0 %v862
    %1341 = vmatpush1.msra.mxu0 %v861
    %1342 = vmatprep.subr.mxu0 0.0
    %1343 = vmatpush1.msra.mxu0 0.0
    %1344 = vmatprep.subr.mxu0 0.0
    %1345 = vmatpush1.msra.mxu0 0.0
    %1346 = vmatprep.subr.mxu0 0.0
    %1347 = vmatpush1.msra.mxu0 0.0
    %1348 = vmatprep.subr.mxu0 0.0
    %1349 = vmatpush1.msra.mxu0 0.0
    %1350 = vmatprep.subr.mxu0 0.0
    %1351 = vmatpush1.msra.mxu0 0.0
    %1352 = vmatprep.subr.mxu0 0.0
    %1353 = vmatpush1.msra.mxu0 0.0
    %1354 = vmatprep.subr.mxu0 0.0
    %1355 = vmatpush1.msra.mxu0 0.0
    %1356 = vmatprep.subr.mxu0 0.0
    %1357 = vmatpush1.msra.mxu0 0.0
    %1358 = vmatprep.subr.mxu0 0.0
    %1359 = vmatpush1.msra.mxu0 0.0
    %1360 = vmatprep.subr.mxu0 0.0
    %1361 = vmatpush1.msra.mxu0 0.0
    %1362 = vmatprep.subr.mxu0 0.0
    %1363 = vmatpush1.msra.mxu0 0.0
    %1364 = vmatprep.subr.mxu0 0.0
    %1365 = vmatpush1.msra.mxu0 0.0
    %1366 = vmatprep.subr.mxu0 0.0
    %1367 = vmatpush1.msra.mxu0 0.0
    %1368 = vmatprep.subr.mxu0 0.0
    %1369 = vmatpush1.msra.mxu0 0.0
    %1370 = vmatprep.subr.mxu0 0.0
    %1371 = vmatpush1.msra.mxu0 0.0
    %1372 = vmatprep.subr.mxu0 0.0
    %1373 = vmatpush1.msra.mxu0 0.0
    %1374 = vmatprep.mubr.f32.mxu0 0.0
    %1375 = vmatmul.mubr.f32.gmra.mrb[0].mxu0 %v1225
    %v1376 = vpop.f32.mrb[0].mxu0
    %v1377 = vadd.f32 0.0, %v1376
    %v1378 = vpop.f32.mrb[0].mxu0
    %v1379 = vadd.f32 0.0, %v1378
    %1380 = vdwg.mxu0
    %v1381 = vadd.f32 %v1235, %v1306
    %v1382 = vadd.f32 %v1236, %v1308
    %v1383 = vadd.f32 %v1237, %v1377
    %v1384 = vadd.f32 %v1238, %v1379
    %v1385 = vxor.u32 %v1381, 2147483648
    %v1386 = vmul.f32 %v1385, 1.442695
    %v1387 = vpow.pop %v1386
    %v1388 = vadd.f32 %v1387, 1.0
    %v1389 = vrcp.pop %v1388
    %v1390 = vmul.f32 1.0, %v1389
    %v1391 = vxor.u32 %v1382, 2147483648
    %v1392 = vmul.f32 %v1391, 1.442695
    %v1393 = vpow.pop %v1392
    %v1394 = vadd.f32 %v1393, 1.0
    %v1395 = vrcp.pop %v1394
    %v1396 = vmul.f32 1.0, %v1395
    %v1397 = vtanh.pop %v1383
    %v1398 = vxor.u32 %v1384, 2147483648
    %v1399 = vmul.f32 %v1398, 1.442695
    %v1400 = vpow.pop %v1399
    %v1401 = vadd.f32 %v1400, 1.0
    %v1402 = vrcp.pop %v1401
    %v1403 = vmul.f32 1.0, %v1402
    %v1404 = vmul.f32 %v1396, %v1223
    %v1405 = vmul.f32 %v1390, %v1397
    %v1406 = vadd.f32 %v1404, %v1405
    %v1407 = vtanh.pop %v1406
    %v1408 = vmul.f32 %v1403, %v1407
    %s1409 = scalar_lea.vmem [#allocation12], 16
    %1410 = vst [vmem:[%s1409] sm:$0xff] %v1408
    %s1411 = smul.u32 3, 4
    %s1412 = smul.addr %s1411, 8
    %s1413 = scalar_lea.vmem [#allocation2], %s1412
    %v1414 = vld [vmem:[%s1413] sm:$0xff]
    %v1415 = vld [vmem:[%s1413 + $0x8] sm:$0xff]
    %v1416 = vld [vmem:[%s1413 + $0x10] sm:$0xff]
    %v1417 = vld [vmem:[%s1413 + $0x18] sm:$0xff]
    %v1418 = vadd.f32 %v1414, %v724
    %v1419 = vadd.f32 %v1415, %v726
    %v1420 = vadd.f32 %v1416, %v795
    %v1421 = vadd.f32 %v1417, %v797
    %1422 = vmatprep.subr.mxu0 %v800
    %1423 = vmatpush1.msra.mxu0 %v799
    %1424 = vmatprep.subr.mxu0 %v804
    %1425 = vmatpush1.msra.mxu0 %v803
    %1426 = vmatprep.subr.mxu0 %v808
    %1427 = vmatpush1.msra.mxu0 %v807
    %1428 = vmatprep.subr.mxu0 %v812
    %1429 = vmatpush1.msra.mxu0 %v811
    %1430 = vmatprep.subr.mxu0 %v816
    %1431 = vmatpush1.msra.mxu0 %v815
    %1432 = vmatprep.subr.mxu0 %v820
    %1433 = vmatpush1.msra.mxu0 %v819
    %1434 = vmatprep.subr.mxu0 %v824
    %1435 = vmatpush1.msra.mxu0 %v823
    %1436 = vmatprep.subr.mxu0 %v828
    %1437 = vmatpush1.msra.mxu0 %v827
    %1438 = vmatprep.subr.mxu0 %v832
    %1439 = vmatpush1.msra.mxu0 %v831
    %1440 = vmatprep.subr.mxu0 %v836
    %1441 = vmatpush1.msra.mxu0 %v835
    %1442 = vmatprep.subr.mxu0 %v840
    %1443 = vmatpush1.msra.mxu0 %v839
    %1444 = vmatprep.subr.mxu0 %v844
    %1445 = vmatpush1.msra.mxu0 %v843
    %1446 = vmatprep.subr.mxu0 %v848
    %1447 = vmatpush1.msra.mxu0 %v847
    %1448 = vmatprep.subr.mxu0 %v852
    %1449 = vmatpush1.msra.mxu0 %v851
    %1450 = vmatprep.subr.mxu0 %v856
    %1451 = vmatpush1.msra.mxu0 %v855
    %1452 = vmatprep.subr.mxu0 %v860
    %1453 = vmatpush1.msra.mxu0 %v859
    %1454 = vmatprep.subr.mxu0 0.0
    %1455 = vmatpush1.msra.mxu0 0.0
    %1456 = vmatprep.subr.mxu0 0.0
    %1457 = vmatpush1.msra.mxu0 0.0
    %1458 = vmatprep.subr.mxu0 0.0
    %1459 = vmatpush1.msra.mxu0 0.0
    %1460 = vmatprep.subr.mxu0 0.0
    %1461 = vmatpush1.msra.mxu0 0.0
    %1462 = vmatprep.subr.mxu0 0.0
    %1463 = vmatpush1.msra.mxu0 0.0
    %1464 = vmatprep.subr.mxu0 0.0
    %1465 = vmatpush1.msra.mxu0 0.0
    %1466 = vmatprep.subr.mxu0 0.0
    %1467 = vmatpush1.msra.mxu0 0.0
    %1468 = vmatprep.subr.mxu0 0.0
    %1469 = vmatpush1.msra.mxu0 0.0
    %1470 = vmatprep.subr.mxu0 0.0
    %1471 = vmatpush1.msra.mxu0 0.0
    %1472 = vmatprep.subr.mxu0 0.0
    %1473 = vmatpush1.msra.mxu0 0.0
    %1474 = vmatprep.subr.mxu0 0.0
    %1475 = vmatpush1.msra.mxu0 0.0
    %1476 = vmatprep.subr.mxu0 0.0
    %1477 = vmatpush1.msra.mxu0 0.0
    %1478 = vmatprep.subr.mxu0 0.0
    %1479 = vmatpush1.msra.mxu0 0.0
    %1480 = vmatprep.subr.mxu0 0.0
    %1481 = vmatpush1.msra.mxu0 0.0
    %1482 = vmatprep.subr.mxu0 0.0
    %1483 = vmatpush1.msra.mxu0 0.0
    %1484 = vmatprep.subr.mxu0 0.0
    %1485 = vmatpush1.msra.mxu0 0.0
    %1486 = vmatprep.mubr.f32.mxu0 0.0
    %1487 = vmatmul.mubr.f32.gmra.mrb[0].mxu0 %v1408
    %v1488 = vpop.f32.mrb[0].mxu0
    %v1489 = vadd.f32 0.0, %v1488
    %v1490 = vpop.f32.mrb[0].mxu0
    %v1491 = vadd.f32 0.0, %v1490
    %1492 = vdwg.mxu0
    %1493 = vmatprep.subr.mxu0 %v802
    %1494 = vmatpush1.msra.mxu0 %v801
    %1495 = vmatprep.subr.mxu0 %v806
    %1496 = vmatpush1.msra.mxu0 %v805
    %1497 = vmatprep.subr.mxu0 %v810
    %1498 = vmatpush1.msra.mxu0 %v809
    %1499 = vmatprep.subr.mxu0 %v814
    %1500 = vmatpush1.msra.mxu0 %v813
    %1501 = vmatprep.subr.mxu0 %v818
    %1502 = vmatpush1.msra.mxu0 %v817
    %1503 = vmatprep.subr.mxu0 %v822
    %1504 = vmatpush1.msra.mxu0 %v821
    %1505 = vmatprep.subr.mxu0 %v826
    %1506 = vmatpush1.msra.mxu0 %v825
    %1507 = vmatprep.subr.mxu0 %v830
    %1508 = vmatpush1.msra.mxu0 %v829
    %1509 = vmatprep.subr.mxu0 %v834
    %1510 = vmatpush1.msra.mxu0 %v833
    %1511 = vmatprep.subr.mxu0 %v838
    %1512 = vmatpush1.msra.mxu0 %v837
    %1513 = vmatprep.subr.mxu0 %v842
    %1514 = vmatpush1.msra.mxu0 %v841
    %1515 = vmatprep.subr.mxu0 %v846
    %1516 = vmatpush1.msra.mxu0 %v845
    %1517 = vmatprep.subr.mxu0 %v850
    %1518 = vmatpush1.msra.mxu0 %v849
    %1519 = vmatprep.subr.mxu0 %v854
    %1520 = vmatpush1.msra.mxu0 %v853
    %1521 = vmatprep.subr.mxu0 %v858
    %1522 = vmatpush1.msra.mxu0 %v857
    %1523 = vmatprep.subr.mxu0 %v862
    %1524 = vmatpush1.msra.mxu0 %v861
    %1525 = vmatprep.subr.mxu0 0.0
    %1526 = vmatpush1.msra.mxu0 0.0
    %1527 = vmatprep.subr.mxu0 0.0
    %1528 = vmatpush1.msra.mxu0 0.0
    %1529 = vmatprep.subr.mxu0 0.0
    %1530 = vmatpush1.msra.mxu0 0.0
    %1531 = vmatprep.subr.mxu0 0.0
    %1532 = vmatpush1.msra.mxu0 0.0
    %1533 = vmatprep.subr.mxu0 0.0
    %1534 = vmatpush1.msra.mxu0 0.0
    %1535 = vmatprep.subr.mxu0 0.0
    %1536 = vmatpush1.msra.mxu0 0.0
    %1537 = vmatprep.subr.mxu0 0.0
    %1538 = vmatpush1.msra.mxu0 0.0
    %1539 = vmatprep.subr.mxu0 0.0
    %1540 = vmatpush1.msra.mxu0 0.0
    %1541 = vmatprep.subr.mxu0 0.0
    %1542 = vmatpush1.msra.mxu0 0.0
    %1543 = vmatprep.subr.mxu0 0.0
    %1544 = vmatpush1.msra.mxu0 0.0
    %1545 = vmatprep.subr.mxu0 0.0
    %1546 = vmatpush1.msra.mxu0 0.0
    %1547 = vmatprep.subr.mxu0 0.0
    %1548 = vmatpush1.msra.mxu0 0.0
    %1549 = vmatprep.subr.mxu0 0.0
    %1550 = vmatpush1.msra.mxu0 0.0
    %1551 = vmatprep.subr.mxu0 0.0
    %1552 = vmatpush1.msra.mxu0 0.0
    %1553 = vmatprep.subr.mxu0 0.0
    %1554 = vmatpush1.msra.mxu0 0.0
    %1555 = vmatprep.subr.mxu0 0.0
    %1556 = vmatpush1.msra.mxu0 0.0
    %1557 = vmatprep.mubr.f32.mxu0 0.0
    %1558 = vmatmul.mubr.f32.gmra.mrb[0].mxu0 %v1408
    %v1559 = vpop.f32.mrb[0].mxu0
    %v1560 = vadd.f32 0.0, %v1559
    %v1561 = vpop.f32.mrb[0].mxu0
    %v1562 = vadd.f32 0.0, %v1561
    %1563 = vdwg.mxu0
    %v1564 = vadd.f32 %v1418, %v1489
    %v1565 = vadd.f32 %v1419, %v1491
    %v1566 = vadd.f32 %v1420, %v1560
    %v1567 = vadd.f32 %v1421, %v1562
    %v1568 = vxor.u32 %v1564, 2147483648
    %v1569 = vmul.f32 %v1568, 1.442695
    %v1570 = vpow.pop %v1569
    %v1571 = vadd.f32 %v1570, 1.0
    %v1572 = vrcp.pop %v1571
    %v1573 = vmul.f32 1.0, %v1572
    %v1574 = vxor.u32 %v1565, 2147483648
    %v1575 = vmul.f32 %v1574, 1.442695
    %v1576 = vpow.pop %v1575
    %v1577 = vadd.f32 %v1576, 1.0
    %v1578 = vrcp.pop %v1577
    %v1579 = vmul.f32 1.0, %v1578
    %v1580 = vtanh.pop %v1566
    %v1581 = vxor.u32 %v1567, 2147483648
    %v1582 = vmul.f32 %v1581, 1.442695
    %v1583 = vpow.pop %v1582
    %v1584 = vadd.f32 %v1583, 1.0
    %v1585 = vrcp.pop %v1584
    %v1586 = vmul.f32 1.0, %v1585
    %v1587 = vmul.f32 %v1579, %v1406
    %v1588 = vmul.f32 %v1573, %v1580
    %v1589 = vadd.f32 %v1587, %v1588
    %v1590 = vtanh.pop %v1589
    %v1591 = vmul.f32 %v1586, %v1590
    %s1592 = scalar_lea.vmem [#allocation12], 24
    %1593 = vst [vmem:[%s1592] sm:$0xff] %v1591
    %s1594 = smul.u32 4, 4
    %s1595 = smul.addr %s1594, 8
    %s1596 = scalar_lea.vmem [#allocation2], %s1595
    %v1597 = vld [vmem:[%s1596] sm:$0xff]
    %v1598 = vld [vmem:[%s1596 + $0x8] sm:$0xff]
    %v1599 = vld [vmem:[%s1596 + $0x10] sm:$0xff]
    %v1600 = vld [vmem:[%s1596 + $0x18] sm:$0xff]
    %v1601 = vadd.f32 %v1597, %v724
    %v1602 = vadd.f32 %v1598, %v726
    %v1603 = vadd.f32 %v1599, %v795
    %v1604 = vadd.f32 %v1600, %v797
    %1605 = vmatprep.subr.mxu0 %v800
    %1606 = vmatpush1.msra.mxu0 %v799
    %1607 = vmatprep.subr.mxu0 %v804
    %1608 = vmatpush1.msra.mxu0 %v803
    %1609 = vmatprep.subr.mxu0 %v808
    %1610 = vmatpush1.msra.mxu0 %v807
    %1611 = vmatprep.subr.mxu0 %v812
    %1612 = vmatpush1.msra.mxu0 %v811
    %1613 = vmatprep.subr.mxu0 %v816
    %1614 = vmatpush1.msra.mxu0 %v815
    %1615 = vmatprep.subr.mxu0 %v820
    %1616 = vmatpush1.msra.mxu0 %v819
    %1617 = vmatprep.subr.mxu0 %v824
    %1618 = vmatpush1.msra.mxu0 %v823
    %1619 = vmatprep.subr.mxu0 %v828
    %1620 = vmatpush1.msra.mxu0 %v827
    %1621 = vmatprep.subr.mxu0 %v832
    %1622 = vmatpush1.msra.mxu0 %v831
    %1623 = vmatprep.subr.mxu0 %v836
    %1624 = vmatpush1.msra.mxu0 %v835
    %1625 = vmatprep.subr.mxu0 %v840
    %1626 = vmatpush1.msra.mxu0 %v839
    %1627 = vmatprep.subr.mxu0 %v844
    %1628 = vmatpush1.msra.mxu0 %v843
    %1629 = vmatprep.subr.mxu0 %v848
    %1630 = vmatpush1.msra.mxu0 %v847
    %1631 = vmatprep.subr.mxu0 %v852
    %1632 = vmatpush1.msra.mxu0 %v851
    %1633 = vmatprep.subr.mxu0 %v856
    %1634 = vmatpush1.msra.mxu0 %v855
    %1635 = vmatprep.subr.mxu0 %v860
    %1636 = vmatpush1.msra.mxu0 %v859
    %1637 = vmatprep.subr.mxu0 0.0
    %1638 = vmatpush1.msra.mxu0 0.0
    %1639 = vmatprep.subr.mxu0 0.0
    %1640 = vmatpush1.msra.mxu0 0.0
    %1641 = vmatprep.subr.mxu0 0.0
    %1642 = vmatpush1.msra.mxu0 0.0
    %1643 = vmatprep.subr.mxu0 0.0
    %1644 = vmatpush1.msra.mxu0 0.0
    %1645 = vmatprep.subr.mxu0 0.0
    %1646 = vmatpush1.msra.mxu0 0.0
    %1647 = vmatprep.subr.mxu0 0.0
    %1648 = vmatpush1.msra.mxu0 0.0
    %1649 = vmatprep.subr.mxu0 0.0
    %1650 = vmatpush1.msra.mxu0 0.0
    %1651 = vmatprep.subr.mxu0 0.0
    %1652 = vmatpush1.msra.mxu0 0.0
    %1653 = vmatprep.subr.mxu0 0.0
    %1654 = vmatpush1.msra.mxu0 0.0
    %1655 = vmatprep.subr.mxu0 0.0
    %1656 = vmatpush1.msra.mxu0 0.0
    %1657 = vmatprep.subr.mxu0 0.0
    %1658 = vmatpush1.msra.mxu0 0.0
    %1659 = vmatprep.subr.mxu0 0.0
    %1660 = vmatpush1.msra.mxu0 0.0
    %1661 = vmatprep.subr.mxu0 0.0
    %1662 = vmatpush1.msra.mxu0 0.0
    %1663 = vmatprep.subr.mxu0 0.0
    %1664 = vmatpush1.msra.mxu0 0.0
    %1665 = vmatprep.subr.mxu0 0.0
    %1666 = vmatpush1.msra.mxu0 0.0
    %1667 = vmatprep.subr.mxu0 0.0
    %1668 = vmatpush1.msra.mxu0 0.0
    %1669 = vmatprep.mubr.f32.mxu0 0.0
    %1670 = vmatmul.mubr.f32.gmra.mrb[0].mxu0 %v1591
    %v1671 = vpop.f32.mrb[0].mxu0
    %v1672 = vadd.f32 0.0, %v1671
    %v1673 = vpop.f32.mrb[0].mxu0
    %v1674 = vadd.f32 0.0, %v1673
    %1675 = vdwg.mxu0
    %1676 = vmatprep.subr.mxu0 %v802
    %1677 = vmatpush1.msra.mxu0 %v801
    %1678 = vmatprep.subr.mxu0 %v806
    %1679 = vmatpush1.msra.mxu0 %v805
    %1680 = vmatprep.subr.mxu0 %v810
    %1681 = vmatpush1.msra.mxu0 %v809
    %1682 = vmatprep.subr.mxu0 %v814
    %1683 = vmatpush1.msra.mxu0 %v813
    %1684 = vmatprep.subr.mxu0 %v818
    %1685 = vmatpush1.msra.mxu0 %v817
    %1686 = vmatprep.subr.mxu0 %v822
    %1687 = vmatpush1.msra.mxu0 %v821
    %1688 = vmatprep.subr.mxu0 %v826
    %1689 = vmatpush1.msra.mxu0 %v825
    %1690 = vmatprep.subr.mxu0 %v830
    %1691 = vmatpush1.msra.mxu0 %v829
    %1692 = vmatprep.subr.mxu0 %v834
    %1693 = vmatpush1.msra.mxu0 %v833
    %1694 = vmatprep.subr.mxu0 %v838
    %1695 = vmatpush1.msra.mxu0 %v837
    %1696 = vmatprep.subr.mxu0 %v842
    %1697 = vmatpush1.msra.mxu0 %v841
    %1698 = vmatprep.subr.mxu0 %v846
    %1699 = vmatpush1.msra.mxu0 %v845
    %1700 = vmatprep.subr.mxu0 %v850
    %1701 = vmatpush1.msra.mxu0 %v849
    %1702 = vmatprep.subr.mxu0 %v854
    %1703 = vmatpush1.msra.mxu0 %v853
    %1704 = vmatprep.subr.mxu0 %v858
    %1705 = vmatpush1.msra.mxu0 %v857
    %1706 = vmatprep.subr.mxu0 %v862
    %1707 = vmatpush1.msra.mxu0 %v861
    %1708 = vmatprep.subr.mxu0 0.0
    %1709 = vmatpush1.msra.mxu0 0.0
    %1710 = vmatprep.subr.mxu0 0.0
    %1711 = vmatpush1.msra.mxu0 0.0
    %1712 = vmatprep.subr.mxu0 0.0
    %1713 = vmatpush1.msra.mxu0 0.0
    %1714 = vmatprep.subr.mxu0 0.0
    %1715 = vmatpush1.msra.mxu0 0.0
    %1716 = vmatprep.subr.mxu0 0.0
    %1717 = vmatpush1.msra.mxu0 0.0
    %1718 = vmatprep.subr.mxu0 0.0
    %1719 = vmatpush1.msra.mxu0 0.0
    %1720 = vmatprep.subr.mxu0 0.0
    %1721 = vmatpush1.msra.mxu0 0.0
    %1722 = vmatprep.subr.mxu0 0.0
    %1723 = vmatpush1.msra.mxu0 0.0
    %1724 = vmatprep.subr.mxu0 0.0
    %1725 = vmatpush1.msra.mxu0 0.0
    %1726 = vmatprep.subr.mxu0 0.0
    %1727 = vmatpush1.msra.mxu0 0.0
    %1728 = vmatprep.subr.mxu0 0.0
    %1729 = vmatpush1.msra.mxu0 0.0
    %1730 = vmatprep.subr.mxu0 0.0
    %1731 = vmatpush1.msra.mxu0 0.0
    %1732 = vmatprep.subr.mxu0 0.0
    %1733 = vmatpush1.msra.mxu0 0.0
    %1734 = vmatprep.subr.mxu0 0.0
    %1735 = vmatpush1.msra.mxu0 0.0
    %1736 = vmatprep.subr.mxu0 0.0
    %1737 = vmatpush1.msra.mxu0 0.0
    %1738 = vmatprep.subr.mxu0 0.0
    %1739 = vmatpush1.msra.mxu0 0.0
    %1740 = vmatprep.mubr.f32.mxu0 0.0
    %1741 = vmatmul.mubr.f32.gmra.mrb[0].mxu0 %v1591
    %v1742 = vpop.f32.mrb[0].mxu0
    %v1743 = vadd.f32 0.0, %v1742
    %v1744 = vpop.f32.mrb[0].mxu0
    %v1745 = vadd.f32 0.0, %v1744
    %1746 = vdwg.mxu0
    %v1747 = vadd.f32 %v1601, %v1672
    %v1748 = vadd.f32 %v1602, %v1674
    %v1749 = vadd.f32 %v1603, %v1743
    %v1750 = vadd.f32 %v1604, %v1745
    %v1751 = vxor.u32 %v1747, 2147483648
    %v1752 = vmul.f32 %v1751, 1.442695
    %v1753 = vpow.pop %v1752
    %v1754 = vadd.f32 %v1753, 1.0
    %v1755 = vrcp.pop %v1754
    %v1756 = vmul.f32 1.0, %v1755
    %v1757 = vxor.u32 %v1748, 2147483648
    %v1758 = vmul.f32 %v1757, 1.442695
    %v1759 = vpow.pop %v1758
    %v1760 = vadd.f32 %v1759, 1.0
    %v1761 = vrcp.pop %v1760
    %v1762 = vmul.f32 1.0, %v1761
    %v1763 = vtanh.pop %v1749
    %v1764 = vxor.u32 %v1750, 2147483648
    %v1765 = vmul.f32 %v1764, 1.442695
    %v1766 = vpow.pop %v1765
    %v1767 = vadd.f32 %v1766, 1.0
    %v1768 = vrcp.pop %v1767
    %v1769 = vmul.f32 1.0, %v1768
    %v1770 = vmul.f32 %v1762, %v1589
    %v1771 = vmul.f32 %v1756, %v1763
    %v1772 = vadd.f32 %v1770, %v1771
    %v1773 = vtanh.pop %v1772
    %v1774 = vmul.f32 %v1769, %v1773
    %s1775 = scalar_lea.vmem [#allocation12], 32
    %1776 = vst [vmem:[%s1775] sm:$0xff] %v1774
    %s1777 = smul.u32 5, 4
    %s1778 = smul.addr %s1777, 8
    %s1779 = scalar_lea.vmem [#allocation2], %s1778
    %v1780 = vld [vmem:[%s1779] sm:$0xff]
    %v1781 = vld [vmem:[%s1779 + $0x8] sm:$0xff]
    %v1782 = vld [vmem:[%s1779 + $0x10] sm:$0xff]
    %v1783 = vld [vmem:[%s1779 + $0x18] sm:$0xff]
    %v1784 = vadd.f32 %v1780, %v724
    %v1785 = vadd.f32 %v1781, %v726
    %v1786 = vadd.f32 %v1782, %v795
    %v1787 = vadd.f32 %v1783, %v797
    %1788 = vmatprep.subr.mxu0 %v800
    %1789 = vmatpush1.msra.mxu0 %v799
    %1790 = vmatprep.subr.mxu0 %v804
    %1791 = vmatpush1.msra.mxu0 %v803
    %1792 = vmatprep.subr.mxu0 %v808
    %1793 = vmatpush1.msra.mxu0 %v807
    %1794 = vmatprep.subr.mxu0 %v812
    %1795 = vmatpush1.msra.mxu0 %v811
    %1796 = vmatprep.subr.mxu0 %v816
    %1797 = vmatpush1.msra.mxu0 %v815
    %1798 = vmatprep.subr.mxu0 %v820
    %1799 = vmatpush1.msra.mxu0 %v819
    %1800 = vmatprep.subr.mxu0 %v824
    %1801 = vmatpush1.msra.mxu0 %v823
    %1802 = vmatprep.subr.mxu0 %v828
    %1803 = vmatpush1.msra.mxu0 %v827
    %1804 = vmatprep.subr.mxu0 %v832
    %1805 = vmatpush1.msra.mxu0 %v831
    %1806 = vmatprep.subr.mxu0 %v836
    %1807 = vmatpush1.msra.mxu0 %v835
    %1808 = vmatprep.subr.mxu0 %v840
    %1809 = vmatpush1.msra.mxu0 %v839
    %1810 = vmatprep.subr.mxu0 %v844
    %1811 = vmatpush1.msra.mxu0 %v843
    %1812 = vmatprep.subr.mxu0 %v848
    %1813 = vmatpush1.msra.mxu0 %v847
    %1814 = vmatprep.subr.mxu0 %v852
    %1815 = vmatpush1.msra.mxu0 %v851
    %1816 = vmatprep.subr.mxu0 %v856
    %1817 = vmatpush1.msra.mxu0 %v855
    %1818 = vmatprep.subr.mxu0 %v860
    %1819 = vmatpush1.msra.mxu0 %v859
    %1820 = vmatprep.subr.mxu0 0.0
    %1821 = vmatpush1.msra.mxu0 0.0
    %1822 = vmatprep.subr.mxu0 0.0
    %1823 = vmatpush1.msra.mxu0 0.0
    %1824 = vmatprep.subr.mxu0 0.0
    %1825 = vmatpush1.msra.mxu0 0.0
    %1826 = vmatprep.subr.mxu0 0.0
    %1827 = vmatpush1.msra.mxu0 0.0
    %1828 = vmatprep.subr.mxu0 0.0
    %1829 = vmatpush1.msra.mxu0 0.0
    %1830 = vmatprep.subr.mxu0 0.0
    %1831 = vmatpush1.msra.mxu0 0.0
    %1832 = vmatprep.subr.mxu0 0.0
    %1833 = vmatpush1.msra.mxu0 0.0
    %1834 = vmatprep.subr.mxu0 0.0
    %1835 = vmatpush1.msra.mxu0 0.0
    %1836 = vmatprep.subr.mxu0 0.0
    %1837 = vmatpush1.msra.mxu0 0.0
    %1838 = vmatprep.subr.mxu0 0.0
    %1839 = vmatpush1.msra.mxu0 0.0
    %1840 = vmatprep.subr.mxu0 0.0
    %1841 = vmatpush1.msra.mxu0 0.0
    %1842 = vmatprep.subr.mxu0 0.0
    %1843 = vmatpush1.msra.mxu0 0.0
    %1844 = vmatprep.subr.mxu0 0.0
    %1845 = vmatpush1.msra.mxu0 0.0
    %1846 = vmatprep.subr.mxu0 0.0
    %1847 = vmatpush1.msra.mxu0 0.0
    %1848 = vmatprep.subr.mxu0 0.0
    %1849 = vmatpush1.msra.mxu0 0.0
    %1850 = vmatprep.subr.mxu0 0.0
    %1851 = vmatpush1.msra.mxu0 0.0
    %1852 = vmatprep.mubr.f32.mxu0 0.0
    %1853 = vmatmul.mubr.f32.gmra.mrb[0].mxu0 %v1774
    %v1854 = vpop.f32.mrb[0].mxu0
    %v1855 = vadd.f32 0.0, %v1854
    %v1856 = vpop.f32.mrb[0].mxu0
    %v1857 = vadd.f32 0.0, %v1856
    %1858 = vdwg.mxu0
    %1859 = vmatprep.subr.mxu0 %v802
    %1860 = vmatpush1.msra.mxu0 %v801
    %1861 = vmatprep.subr.mxu0 %v806
    %1862 = vmatpush1.msra.mxu0 %v805
    %1863 = vmatprep.subr.mxu0 %v810
    %1864 = vmatpush1.msra.mxu0 %v809
    %1865 = vmatprep.subr.mxu0 %v814
    %1866 = vmatpush1.msra.mxu0 %v813
    %1867 = vmatprep.subr.mxu0 %v818
    %1868 = vmatpush1.msra.mxu0 %v817
    %1869 = vmatprep.subr.mxu0 %v822
    %1870 = vmatpush1.msra.mxu0 %v821
    %1871 = vmatprep.subr.mxu0 %v826
    %1872 = vmatpush1.msra.mxu0 %v825
    %1873 = vmatprep.subr.mxu0 %v830
    %1874 = vmatpush1.msra.mxu0 %v829
    %1875 = vmatprep.subr.mxu0 %v834
    %1876 = vmatpush1.msra.mxu0 %v833
    %1877 = vmatprep.subr.mxu0 %v838
    %1878 = vmatpush1.msra.mxu0 %v837
    %1879 = vmatprep.subr.mxu0 %v842
    %1880 = vmatpush1.msra.mxu0 %v841
    %1881 = vmatprep.subr.mxu0 %v846
    %1882 = vmatpush1.msra.mxu0 %v845
    %1883 = vmatprep.subr.mxu0 %v850
    %1884 = vmatpush1.msra.mxu0 %v849
    %1885 = vmatprep.subr.mxu0 %v854
    %1886 = vmatpush1.msra.mxu0 %v853
    %1887 = vmatprep.subr.mxu0 %v858
    %1888 = vmatpush1.msra.mxu0 %v857
    %1889 = vmatprep.subr.mxu0 %v862
    %1890 = vmatpush1.msra.mxu0 %v861
    %1891 = vmatprep.subr.mxu0 0.0
    %1892 = vmatpush1.msra.mxu0 0.0
    %1893 = vmatprep.subr.mxu0 0.0
    %1894 = vmatpush1.msra.mxu0 0.0
    %1895 = vmatprep.subr.mxu0 0.0
    %1896 = vmatpush1.msra.mxu0 0.0
    %1897 = vmatprep.subr.mxu0 0.0
    %1898 = vmatpush1.msra.mxu0 0.0
    %1899 = vmatprep.subr.mxu0 0.0
    %1900 = vmatpush1.msra.mxu0 0.0
    %1901 = vmatprep.subr.mxu0 0.0
    %1902 = vmatpush1.msra.mxu0 0.0
    %1903 = vmatprep.subr.mxu0 0.0
    %1904 = vmatpush1.msra.mxu0 0.0
    %1905 = vmatprep.subr.mxu0 0.0
    %1906 = vmatpush1.msra.mxu0 0.0
    %1907 = vmatprep.subr.mxu0 0.0
    %1908 = vmatpush1.msra.mxu0 0.0
    %1909 = vmatprep.subr.mxu0 0.0
    %1910 = vmatpush1.msra.mxu0 0.0
    %1911 = vmatprep.subr.mxu0 0.0
    %1912 = vmatpush1.msra.mxu0 0.0
    %1913 = vmatprep.subr.mxu0 0.0
    %1914 = vmatpush1.msra.mxu0 0.0
    %1915 = vmatprep.subr.mxu0 0.0
    %1916 = vmatpush1.msra.mxu0 0.0
    %1917 = vmatprep.subr.mxu0 0.0
    %1918 = vmatpush1.msra.mxu0 0.0
    %1919 = vmatprep.subr.mxu0 0.0
    %1920 = vmatpush1.msra.mxu0 0.0
    %1921 = vmatprep.subr.mxu0 0.0
    %1922 = vmatpush1.msra.mxu0 0.0
    %1923 = vmatprep.mubr.f32.mxu0 0.0
    %1924 = vmatmul.mubr.f32.gmra.mrb[0].mxu0 %v1774
    %v1925 = vpop.f32.mrb[0].mxu0
    %v1926 = vadd.f32 0.0, %v1925
    %v1927 = vpop.f32.mrb[0].mxu0
    %v1928 = vadd.f32 0.0, %v1927
    %1929 = vdwg.mxu0
    %v1930 = vadd.f32 %v1784, %v1855
    %v1931 = vadd.f32 %v1785, %v1857
    %v1932 = vadd.f32 %v1786, %v1926
    %v1933 = vadd.f32 %v1787, %v1928
    %v1934 = vxor.u32 %v1930, 2147483648
    %v1935 = vmul.f32 %v1934, 1.442695
    %v1936 = vpow.pop %v1935
    %v1937 = vadd.f32 %v1936, 1.0
    %v1938 = vrcp.pop %v1937
    %v1939 = vmul.f32 1.0, %v1938
    %v1940 = vxor.u32 %v1931, 2147483648
    %v1941 = vmul.f32 %v1940, 1.442695
    %v1942 = vpow.pop %v1941
    %v1943 = vadd.f32 %v1942, 1.0
    %v1944 = vrcp.pop %v1943
    %v1945 = vmul.f32 1.0, %v1944
    %v1946 = vtanh.pop %v1932
    %v1947 = vxor.u32 %v1933, 2147483648
    %v1948 = vmul.f32 %v1947, 1.442695
    %v1949 = vpow.pop %v1948
    %v1950 = vadd.f32 %v1949, 1.0
    %v1951 = vrcp.pop %v1950
    %v1952 = vmul.f32 1.0, %v1951
    %v1953 = vmul.f32 %v1945, %v1772
    %v1954 = vmul.f32 %v1939, %v1946
    %v1955 = vadd.f32 %v1953, %v1954
    %v1956 = vtanh.pop %v1955
    %v1957 = vmul.f32 %v1952, %v1956
    %s1958 = scalar_lea.vmem [#allocation12], 40
    %1959 = vst [vmem:[%s1958] sm:$0xff] %v1957
    // Predicated region
    $region62: #{tpu_custom_call.1} parent=1 // pred_check
      _
    $region63: #{tpu_custom_call.1} parent=1 // pred_check_branch
      %1961 = sbr.rel (0) target = $region65
    $region64: #{tpu_custom_call.1} parent=1 // pred_region
      %s1963 = ssub.s32 768, 768
      %1964 = vsyncadd [#allocation5], %s1963
      %s1965 = sshll.u32 [#allocation12], 4
      %s1966 = int_to_ptr.vmem [resolvable:$true] %s1965
      %1971 = dma.vmem_to_hbm [thread:$0]  %s1966, 768, %s10, [#allocation5], 128, 128, 8
    $region65: #{tpu_custom_call.1} parent=1 // pred_fallthru
      _
    // Predicated region
    $region66: #{tpu_custom_call.1} parent=1 // pred_check
      _
    $region67: #{tpu_custom_call.1} parent=1 // pred_check_branch
      %1973 = sbr.rel (0) target = $region69
    $region68: #{tpu_custom_call.1} parent=1 // pred_region
      %1974 = dma.done [#allocation5], 768
    $region69: #{tpu_custom_call.1} parent=1 // pred_fallthru
      _
    %1975 = vsyncpa [#allocation4], 1
    %1976 = vsyncpa [#allocation7], 1
    %1977 = vsyncpa [#allocation10], 1
    %1978 = vsyncpa [#allocation5], 1

</llo_original>
